<compile_context>
chip_gen: v7x
topology: tpu7x:2x2x1
jax: 0.10.0
libtpu: 0.0.40
codegen_flags: <defaults>
</compile_context>

<pallas_src>
import jax
import jax.numpy as jnp
from jax.experimental import pallas as pl
from jax.experimental.pallas import tpu as pltpu

O_PAD = 128  # lane-dense padded logits width (one full vreg lane row)


def char_lstm_seq_kernel(idx_ref, emb_ref, wih_ref, whh_ref, b_ref, h0_ref, c0_ref,
                         wout_ref, bout_ref, logits_ref, hN_ref, cN_ref):
    H = emb_ref.shape[1]
    L = h0_ref.shape[0]
    T = idx_ref.shape[0]

    # --- Off-critical-path precompute -------------------------------------------------
    # Gather all T embedding rows (depends only on SMEM indices, not on the recurrence).
    rows = [emb_ref[pl.ds(idx_ref[t], 1), :] for t in range(T)]     # T x (1, H)
    x_all = jnp.concatenate(rows, axis=0)                           # (T, H)

    # Layer-0 input projection + (pre-summed) bias for every step: one M=T matmul.
    gx0 = (jnp.dot(x_all, wih_ref[0], preferred_element_type=jnp.float32)
           + b_ref[pl.ds(0, 1), :])                                 # (T, 4H)

    # --- Serial recurrence with h/c carried in vregs ----------------------------------
    h = [h0_ref[l] for l in range(L)]                               # each (1, H)
    c = [c0_ref[l] for l in range(L)]
    hs = []
    for t in range(T):                                              # static unroll
        x = None
        for l in range(L):                                          # static unroll
            if l == 0:
                gates = gx0[t:t + 1, :] + jnp.dot(
                    h[0], whh_ref[0], preferred_element_type=jnp.float32)
            else:
                gates = (jnp.dot(x, wih_ref[l], preferred_element_type=jnp.float32)
                         + jnp.dot(h[l], whh_ref[l], preferred_element_type=jnp.float32)
                         + b_ref[pl.ds(l, 1), :])
            # Two full-vreg EUP ops, then cheap lane slices. Gate order [i, f, g, o].
            sig = jax.nn.sigmoid(gates)                             # (1, 4H)
            th = jnp.tanh(gates)                                    # (1, 4H)
            i_g = sig[:, 0:H]
            f_g = sig[:, H:2 * H]
            g_g = th[:, 2 * H:3 * H]
            o_g = sig[:, 3 * H:4 * H]
            c_new = f_g * c[l] + i_g * g_g
            h_new = o_g * jnp.tanh(c_new)
            h[l] = h_new
            c[l] = c_new
            x = h_new                                               # feed next layer
        hs.append(x)

    # --- Output head hoisted out of the loop -------------------------------------------
    h_seq = jnp.concatenate(hs, axis=0)                             # (T, H)
    logits_ref[...] = (jnp.dot(h_seq, wout_ref[...], preferred_element_type=jnp.float32)
                       + bout_ref[...])                             # (T, 128) full store

    # Final state written exactly once.
    for l in range(L):
        hN_ref[l] = h[l]
        cN_ref[l] = c[l]


def char_lstm_forward_seq(idx_seq, emb, w_ih, w_hh, b_ih, b_hh, h0, c0, w_out, b_out):
    """Runs T fused single-character steps of CharLSTMModel.forward.

    Parameters use torch conventions: w_ih/w_hh are (L, 4H, H), b_ih/b_hh are (L, 4H),
    w_out is (O, H), b_out is (O,), h0/c0 are (L, 1, H). Returns (logits (T, O), (hN, cN)).
    """
    T = idx_seq.shape[0]
    L, _, H = h0.shape
    O = w_out.shape[0]
    V = emb.shape[0]

    # Host-side prep: transpose weights for right-multiplication, pre-sum the two biases,
    # pad the output head to a full 128-lane row.
    wih_t = jnp.transpose(w_ih, (0, 2, 1))                           # (L, H, 4H)
    whh_t = jnp.transpose(w_hh, (0, 2, 1))                           # (L, H, 4H)
    b_cat = b_ih + b_hh                                              # (L, 4H)
    wout_pad = jnp.zeros((H, O_PAD), jnp.float32).at[:, :O].set(w_out.T)   # (H, 128)
    bout_pad = jnp.zeros((1, O_PAD), jnp.float32).at[0, :O].set(b_out)     # (1, 128)

    flops = (2 * T * H * 4 * H                    # layer-0 input projection (batched)
             + T * L * 2 * H * 4 * H              # per-step hidden matmuls
             + T * max(L - 1, 0) * 2 * H * 4 * H  # per-step input matmuls, layers >= 1
             + 2 * T * H * O_PAD)                 # output head (batched)
    transcendentals = T * L * 9 * H
    bytes_accessed = 4 * (V * H + 2 * L * H * 4 * H + L * 4 * H + 4 * L * H
                          + H * O_PAD + O_PAD + T * O_PAD + T)

    vmem = pl.BlockSpec(memory_space=pltpu.MemorySpace.VMEM)
    smem = pl.BlockSpec(memory_space=pltpu.MemorySpace.SMEM)

    logits_pad, hN, cN = pl.pallas_call(
        char_lstm_seq_kernel,
        out_shape=(jax.ShapeDtypeStruct((T, O_PAD), jnp.float32),
                   jax.ShapeDtypeStruct((L, 1, H), jnp.float32),
                   jax.ShapeDtypeStruct((L, 1, H), jnp.float32)),
        in_specs=[smem, vmem, vmem, vmem, vmem, vmem, vmem, vmem, vmem],
        out_specs=(vmem, vmem, vmem),
        cost_estimate=pl.CostEstimate(flops=flops, transcendentals=transcendentals,
                                      bytes_accessed=bytes_accessed),
    )(idx_seq, emb, wih_t, whh_t, b_cat, h0, c0, wout_pad, bout_pad)

    return logits_pad[:, :O], (hN, cN)


def ref_forward_seq(idx_seq, emb, w_ih, w_hh, b_ih, b_hh, h0, c0, w_out, b_out):
    """Pure-JAX reference: T sequential torch.nn.LSTM-style single-step forwards."""
    H = h0.shape[-1]
    L = h0.shape[0]
    h = [h0[l] for l in range(L)]
    c = [c0[l] for l in range(L)]
    outs = []
    for t in range(idx_seq.shape[0]):
        x = emb[idx_seq[t]][None, :]
        for l in range(L):
            gates = (x @ w_ih[l].T + h[l] @ w_hh[l].T
                     + b_ih[l][None, :] + b_hh[l][None, :])
            i = jax.nn.sigmoid(gates[:, 0:H])
            f = jax.nn.sigmoid(gates[:, H:2 * H])
            g = jnp.tanh(gates[:, 2 * H:3 * H])
            o = jax.nn.sigmoid(gates[:, 3 * H:4 * H])
            c[l] = f * c[l] + i * g
            h[l] = o * jnp.tanh(c[l])
            x = h[l]
        outs.append(x @ w_out.T + b_out[None, :])
    return jnp.concatenate(outs, axis=0), jnp.stack(h), jnp.stack(c)


if __name__ == "__main__":
    # Shapes implied by the module: vocab (input_size)=16, hidden=32, output=16,
    # n_layers=1; fused sequence of T=8 single-character steps, batch=1.
    V, H, O, L, T = 16, 32, 16, 1, 8

    key = jax.random.PRNGKey(0)
    keys = jax.random.split(key, 10)
    bound = 1.0 / jnp.sqrt(H)

    emb = jax.random.normal(keys[0], (V, H), dtype=jnp.float32)            # Embedding weight
    # torch.nn.LSTM parameter conventions: (4H, in), gate order [i, f, g, o].
    w_ih = jax.random.uniform(keys[1], (L, 4 * H, H), jnp.float32, -bound, bound)
    w_hh = jax.random.uniform(keys[2], (L, 4 * H, H), jnp.float32, -bound, bound)
    b_ih = jax.random.uniform(keys[3], (L, 4 * H), jnp.float32, -bound, bound)
    b_hh = jax.random.uniform(keys[4], (L, 4 * H), jnp.float32, -bound, bound)
    # torch.nn.Linear h2o: weight (O, H), bias (O,).
    w_out = jax.random.uniform(keys[5], (O, H), jnp.float32, -bound, bound)
    b_out = jax.random.uniform(keys[6], (O,), jnp.float32, -bound, bound)
    # Initial hidden state passed into forward().
    h0 = jax.random.normal(keys[7], (L, 1, H), dtype=jnp.float32)
    c0 = jax.random.normal(keys[8], (L, 1, H), dtype=jnp.float32)
    # Sequence of character indices (each step = one module forward call).
    idx_seq = jax.random.randint(keys[9], (T,), 0, V, dtype=jnp.int32)

    fwd = jax.jit(char_lstm_forward_seq)
    logits, (hN, cN) = fwd(idx_seq, emb, w_ih, w_hh, b_ih, b_hh, h0, c0, w_out, b_out)
    jax.block_until_ready((logits, hN, cN))

    logits_ref, hN_ref, cN_ref = ref_forward_seq(idx_seq, emb, w_ih, w_hh, b_ih, b_hh,
                                                 h0, c0, w_out, b_out)
    assert logits.shape == (T, O) and hN.shape == (L, 1, H) and cN.shape == (L, 1, H)
    assert jnp.allclose(logits, logits_ref, atol=1e-5, rtol=1e-5)
    assert jnp.allclose(hN, hN_ref, atol=1e-5, rtol=1e-5)
    assert jnp.allclose(cN, cN_ref, atol=1e-5, rtol=1e-5)

    print("KERNEL_OK")
</pallas_src>

<mosaic_0001>
module attributes {stable_mosaic.version = 11 : i64} {
  func.func @char_lstm_seq_kernel(%arg0: memref<8xi32, #tpu.memory_space<smem>>, %arg1: memref<16x32xf32, #tpu.memory_space<vmem>>, %arg2: memref<1x32x128xf32, #tpu.memory_space<vmem>>, %arg3: memref<1x32x128xf32, #tpu.memory_space<vmem>>, %arg4: memref<1x128xf32, #tpu.memory_space<vmem>>, %arg5: memref<1x1x32xf32, #tpu.memory_space<vmem>>, %arg6: memref<1x1x32xf32, #tpu.memory_space<vmem>>, %arg7: memref<32x128xf32, #tpu.memory_space<vmem>>, %arg8: memref<1x128xf32, #tpu.memory_space<vmem>>, %arg9: memref<8x128xf32, #tpu.memory_space<vmem>>, %arg10: memref<1x1x32xf32, #tpu.memory_space<vmem>>, %arg11: memref<1x1x32xf32, #tpu.memory_space<vmem>>) attributes {dimension_semantics = [], scalar_prefetch = 0 : i64, scratch_operands = 0 : i64, tpu.core_type = #tpu.core_type<tc>} {
    %c0 = arith.constant 0 : index
    %0 = memref.load %arg0[%c0] : memref<8xi32, #tpu.memory_space<smem>>
    %1 = arith.index_cast %0 : i32 to index
    %c0_0 = arith.constant 0 : index
    %2 = vector.load %arg1[%1, %c0_0] : memref<16x32xf32, #tpu.memory_space<vmem>>, vector<1x32xf32>
    %c1 = arith.constant 1 : index
    %3 = memref.load %arg0[%c1] : memref<8xi32, #tpu.memory_space<smem>>
    %4 = arith.index_cast %3 : i32 to index
    %c0_1 = arith.constant 0 : index
    %5 = vector.load %arg1[%4, %c0_1] : memref<16x32xf32, #tpu.memory_space<vmem>>, vector<1x32xf32>
    %c2 = arith.constant 2 : index
    %6 = memref.load %arg0[%c2] : memref<8xi32, #tpu.memory_space<smem>>
    %7 = arith.index_cast %6 : i32 to index
    %c0_2 = arith.constant 0 : index
    %8 = vector.load %arg1[%7, %c0_2] : memref<16x32xf32, #tpu.memory_space<vmem>>, vector<1x32xf32>
    %c3 = arith.constant 3 : index
    %9 = memref.load %arg0[%c3] : memref<8xi32, #tpu.memory_space<smem>>
    %10 = arith.index_cast %9 : i32 to index
    %c0_3 = arith.constant 0 : index
    %11 = vector.load %arg1[%10, %c0_3] : memref<16x32xf32, #tpu.memory_space<vmem>>, vector<1x32xf32>
    %c4 = arith.constant 4 : index
    %12 = memref.load %arg0[%c4] : memref<8xi32, #tpu.memory_space<smem>>
    %13 = arith.index_cast %12 : i32 to index
    %c0_4 = arith.constant 0 : index
    %14 = vector.load %arg1[%13, %c0_4] : memref<16x32xf32, #tpu.memory_space<vmem>>, vector<1x32xf32>
    %c5 = arith.constant 5 : index
    %15 = memref.load %arg0[%c5] : memref<8xi32, #tpu.memory_space<smem>>
    %16 = arith.index_cast %15 : i32 to index
    %c0_5 = arith.constant 0 : index
    %17 = vector.load %arg1[%16, %c0_5] : memref<16x32xf32, #tpu.memory_space<vmem>>, vector<1x32xf32>
    %c6 = arith.constant 6 : index
    %18 = memref.load %arg0[%c6] : memref<8xi32, #tpu.memory_space<smem>>
    %19 = arith.index_cast %18 : i32 to index
    %c0_6 = arith.constant 0 : index
    %20 = vector.load %arg1[%19, %c0_6] : memref<16x32xf32, #tpu.memory_space<vmem>>, vector<1x32xf32>
    %c7 = arith.constant 7 : index
    %21 = memref.load %arg0[%c7] : memref<8xi32, #tpu.memory_space<smem>>
    %22 = arith.index_cast %21 : i32 to index
    %c0_7 = arith.constant 0 : index
    %23 = vector.load %arg1[%22, %c0_7] : memref<16x32xf32, #tpu.memory_space<vmem>>, vector<1x32xf32>
    %24 = tpu.concatenate %2, %5, %8, %11, %14, %17, %20, %23 in 0 : vector<1x32xf32>, vector<1x32xf32>, vector<1x32xf32>, vector<1x32xf32>, vector<1x32xf32>, vector<1x32xf32>, vector<1x32xf32>, vector<1x32xf32> -> vector<8x32xf32>
    %c0_8 = arith.constant 0 : index
    %c0_9 = arith.constant 0 : index
    %c0_10 = arith.constant 0 : index
    %25 = vector.load %arg2[%c0_8, %c0_9, %c0_10] : memref<1x32x128xf32, #tpu.memory_space<vmem>>, vector<1x32x128xf32>
    %26 = vector.shape_cast %25 : vector<1x32x128xf32> to vector<32x128xf32>
    %cst = arith.constant dense<0.000000e+00> : vector<8x128xf32>
    %27 = tpu.matmul %24, %26, %cst {dimension_numbers = #tpu.dot_dimension_numbers<[1], [0], [0], [1], [0, 0, 1, 1], [], []>} : vector<8x32xf32>, vector<32x128xf32>, vector<8x128xf32> -> vector<8x128xf32>
    %c0_11 = arith.constant 0 : index
    %c0_12 = arith.constant 0 : index
    %28 = vector.load %arg4[%c0_11, %c0_12] : memref<1x128xf32, #tpu.memory_space<vmem>>, vector<1x128xf32>
    %29 = vector.broadcast %28 : vector<1x128xf32> to vector<8x128xf32>
    %30 = arith.addf %27, %29 : vector<8x128xf32>
    %c0_13 = arith.constant 0 : index
    %c0_14 = arith.constant 0 : index
    %c0_15 = arith.constant 0 : index
    %31 = vector.load %arg5[%c0_13, %c0_14, %c0_15] : memref<1x1x32xf32, #tpu.memory_space<vmem>>, vector<1x1x32xf32>
    %32 = vector.shape_cast %31 : vector<1x1x32xf32> to vector<1x32xf32>
    %c0_16 = arith.constant 0 : index
    %c0_17 = arith.constant 0 : index
    %c0_18 = arith.constant 0 : index
    %33 = vector.load %arg6[%c0_16, %c0_17, %c0_18] : memref<1x1x32xf32, #tpu.memory_space<vmem>>, vector<1x1x32xf32>
    %34 = vector.shape_cast %33 : vector<1x1x32xf32> to vector<1x32xf32>
    %35 = vector.extract_strided_slice %30 {offsets = [0, 0], sizes = [1, 128], strides = [1, 1]} : vector<8x128xf32> to vector<1x128xf32>
    %c0_19 = arith.constant 0 : index
    %c0_20 = arith.constant 0 : index
    %c0_21 = arith.constant 0 : index
    %36 = vector.load %arg3[%c0_19, %c0_20, %c0_21] : memref<1x32x128xf32, #tpu.memory_space<vmem>>, vector<1x32x128xf32>
    %37 = vector.shape_cast %36 : vector<1x32x128xf32> to vector<32x128xf32>
    %cst_22 = arith.constant dense<0.000000e+00> : vector<1x128xf32>
    %38 = tpu.matmul %32, %37, %cst_22 {dimension_numbers = #tpu.dot_dimension_numbers<[1], [0], [0], [1], [0, 0, 1, 1], [], []>} : vector<1x32xf32>, vector<32x128xf32>, vector<1x128xf32> -> vector<1x128xf32>
    %39 = arith.addf %35, %38 : vector<1x128xf32>
    %40 = arith.negf %39 : vector<1x128xf32>
    %41 = math.exp %40 : vector<1x128xf32>
    %cst_23 = arith.constant 1.000000e+00 : f32
    %42 = vector.broadcast %cst_23 : f32 to vector<1x128xf32>
    %43 = arith.addf %42, %41 : vector<1x128xf32>
    %44 = arith.divf %42, %43 : vector<1x128xf32>
    %45 = math.tanh %39 : vector<1x128xf32>
    %46 = vector.extract_strided_slice %44 {offsets = [0, 0], sizes = [1, 32], strides = [1, 1]} : vector<1x128xf32> to vector<1x32xf32>
    %47 = vector.extract_strided_slice %44 {offsets = [0, 32], sizes = [1, 32], strides = [1, 1]} : vector<1x128xf32> to vector<1x32xf32>
    %48 = vector.extract_strided_slice %45 {offsets = [0, 64], sizes = [1, 32], strides = [1, 1]} : vector<1x128xf32> to vector<1x32xf32>
    %49 = vector.extract_strided_slice %44 {offsets = [0, 96], sizes = [1, 32], strides = [1, 1]} : vector<1x128xf32> to vector<1x32xf32>
    %50 = arith.mulf %47, %34 : vector<1x32xf32>
    %51 = arith.mulf %46, %48 : vector<1x32xf32>
    %52 = arith.addf %50, %51 : vector<1x32xf32>
    %53 = math.tanh %52 : vector<1x32xf32>
    %54 = arith.mulf %49, %53 : vector<1x32xf32>
    %55 = vector.extract_strided_slice %30 {offsets = [1, 0], sizes = [1, 128], strides = [1, 1]} : vector<8x128xf32> to vector<1x128xf32>
    %c0_24 = arith.constant 0 : index
    %c0_25 = arith.constant 0 : index
    %c0_26 = arith.constant 0 : index
    %56 = vector.load %arg3[%c0_24, %c0_25, %c0_26] : memref<1x32x128xf32, #tpu.memory_space<vmem>>, vector<1x32x128xf32>
    %57 = vector.shape_cast %56 : vector<1x32x128xf32> to vector<32x128xf32>
    %cst_27 = arith.constant dense<0.000000e+00> : vector<1x128xf32>
    %58 = tpu.matmul %54, %57, %cst_27 {dimension_numbers = #tpu.dot_dimension_numbers<[1], [0], [0], [1], [0, 0, 1, 1], [], []>} : vector<1x32xf32>, vector<32x128xf32>, vector<1x128xf32> -> vector<1x128xf32>
    %59 = arith.addf %55, %58 : vector<1x128xf32>
    %60 = arith.negf %59 : vector<1x128xf32>
    %61 = math.exp %60 : vector<1x128xf32>
    %cst_28 = arith.constant 1.000000e+00 : f32
    %62 = vector.broadcast %cst_28 : f32 to vector<1x128xf32>
    %63 = arith.addf %62, %61 : vector<1x128xf32>
    %64 = arith.divf %62, %63 : vector<1x128xf32>
    %65 = math.tanh %59 : vector<1x128xf32>
    %66 = vector.extract_strided_slice %64 {offsets = [0, 0], sizes = [1, 32], strides = [1, 1]} : vector<1x128xf32> to vector<1x32xf32>
    %67 = vector.extract_strided_slice %64 {offsets = [0, 32], sizes = [1, 32], strides = [1, 1]} : vector<1x128xf32> to vector<1x32xf32>
    %68 = vector.extract_strided_slice %65 {offsets = [0, 64], sizes = [1, 32], strides = [1, 1]} : vector<1x128xf32> to vector<1x32xf32>
    %69 = vector.extract_strided_slice %64 {offsets = [0, 96], sizes = [1, 32], strides = [1, 1]} : vector<1x128xf32> to vector<1x32xf32>
    %70 = arith.mulf %67, %52 : vector<1x32xf32>
    %71 = arith.mulf %66, %68 : vector<1x32xf32>
    %72 = arith.addf %70, %71 : vector<1x32xf32>
    %73 = math.tanh %72 : vector<1x32xf32>
    %74 = arith.mulf %69, %73 : vector<1x32xf32>
    %75 = vector.extract_strided_slice %30 {offsets = [2, 0], sizes = [1, 128], strides = [1, 1]} : vector<8x128xf32> to vector<1x128xf32>
    %c0_29 = arith.constant 0 : index
    %c0_30 = arith.constant 0 : index
    %c0_31 = arith.constant 0 : index
    %76 = vector.load %arg3[%c0_29, %c0_30, %c0_31] : memref<1x32x128xf32, #tpu.memory_space<vmem>>, vector<1x32x128xf32>
    %77 = vector.shape_cast %76 : vector<1x32x128xf32> to vector<32x128xf32>
    %cst_32 = arith.constant dense<0.000000e+00> : vector<1x128xf32>
    %78 = tpu.matmul %74, %77, %cst_32 {dimension_numbers = #tpu.dot_dimension_numbers<[1], [0], [0], [1], [0, 0, 1, 1], [], []>} : vector<1x32xf32>, vector<32x128xf32>, vector<1x128xf32> -> vector<1x128xf32>
    %79 = arith.addf %75, %78 : vector<1x128xf32>
    %80 = arith.negf %79 : vector<1x128xf32>
    %81 = math.exp %80 : vector<1x128xf32>
    %cst_33 = arith.constant 1.000000e+00 : f32
    %82 = vector.broadcast %cst_33 : f32 to vector<1x128xf32>
    %83 = arith.addf %82, %81 : vector<1x128xf32>
    %84 = arith.divf %82, %83 : vector<1x128xf32>
    %85 = math.tanh %79 : vector<1x128xf32>
    %86 = vector.extract_strided_slice %84 {offsets = [0, 0], sizes = [1, 32], strides = [1, 1]} : vector<1x128xf32> to vector<1x32xf32>
    %87 = vector.extract_strided_slice %84 {offsets = [0, 32], sizes = [1, 32], strides = [1, 1]} : vector<1x128xf32> to vector<1x32xf32>
    %88 = vector.extract_strided_slice %85 {offsets = [0, 64], sizes = [1, 32], strides = [1, 1]} : vector<1x128xf32> to vector<1x32xf32>
    %89 = vector.extract_strided_slice %84 {offsets = [0, 96], sizes = [1, 32], strides = [1, 1]} : vector<1x128xf32> to vector<1x32xf32>
    %90 = arith.mulf %87, %72 : vector<1x32xf32>
    %91 = arith.mulf %86, %88 : vector<1x32xf32>
    %92 = arith.addf %90, %91 : vector<1x32xf32>
    %93 = math.tanh %92 : vector<1x32xf32>
    %94 = arith.mulf %89, %93 : vector<1x32xf32>
    %95 = vector.extract_strided_slice %30 {offsets = [3, 0], sizes = [1, 128], strides = [1, 1]} : vector<8x128xf32> to vector<1x128xf32>
    %c0_34 = arith.constant 0 : index
    %c0_35 = arith.constant 0 : index
    %c0_36 = arith.constant 0 : index
    %96 = vector.load %arg3[%c0_34, %c0_35, %c0_36] : memref<1x32x128xf32, #tpu.memory_space<vmem>>, vector<1x32x128xf32>
    %97 = vector.shape_cast %96 : vector<1x32x128xf32> to vector<32x128xf32>
    %cst_37 = arith.constant dense<0.000000e+00> : vector<1x128xf32>
    %98 = tpu.matmul %94, %97, %cst_37 {dimension_numbers = #tpu.dot_dimension_numbers<[1], [0], [0], [1], [0, 0, 1, 1], [], []>} : vector<1x32xf32>, vector<32x128xf32>, vector<1x128xf32> -> vector<1x128xf32>
    %99 = arith.addf %95, %98 : vector<1x128xf32>
    %100 = arith.negf %99 : vector<1x128xf32>
    %101 = math.exp %100 : vector<1x128xf32>
    %cst_38 = arith.constant 1.000000e+00 : f32
    %102 = vector.broadcast %cst_38 : f32 to vector<1x128xf32>
    %103 = arith.addf %102, %101 : vector<1x128xf32>
    %104 = arith.divf %102, %103 : vector<1x128xf32>
    %105 = math.tanh %99 : vector<1x128xf32>
    %106 = vector.extract_strided_slice %104 {offsets = [0, 0], sizes = [1, 32], strides = [1, 1]} : vector<1x128xf32> to vector<1x32xf32>
    %107 = vector.extract_strided_slice %104 {offsets = [0, 32], sizes = [1, 32], strides = [1, 1]} : vector<1x128xf32> to vector<1x32xf32>
    %108 = vector.extract_strided_slice %105 {offsets = [0, 64], sizes = [1, 32], strides = [1, 1]} : vector<1x128xf32> to vector<1x32xf32>
    %109 = vector.extract_strided_slice %104 {offsets = [0, 96], sizes = [1, 32], strides = [1, 1]} : vector<1x128xf32> to vector<1x32xf32>
    %110 = arith.mulf %107, %92 : vector<1x32xf32>
    %111 = arith.mulf %106, %108 : vector<1x32xf32>
    %112 = arith.addf %110, %111 : vector<1x32xf32>
    %113 = math.tanh %112 : vector<1x32xf32>
    %114 = arith.mulf %109, %113 : vector<1x32xf32>
    %115 = vector.extract_strided_slice %30 {offsets = [4, 0], sizes = [1, 128], strides = [1, 1]} : vector<8x128xf32> to vector<1x128xf32>
    %c0_39 = arith.constant 0 : index
    %c0_40 = arith.constant 0 : index
    %c0_41 = arith.constant 0 : index
    %116 = vector.load %arg3[%c0_39, %c0_40, %c0_41] : memref<1x32x128xf32, #tpu.memory_space<vmem>>, vector<1x32x128xf32>
    %117 = vector.shape_cast %116 : vector<1x32x128xf32> to vector<32x128xf32>
    %cst_42 = arith.constant dense<0.000000e+00> : vector<1x128xf32>
    %118 = tpu.matmul %114, %117, %cst_42 {dimension_numbers = #tpu.dot_dimension_numbers<[1], [0], [0], [1], [0, 0, 1, 1], [], []>} : vector<1x32xf32>, vector<32x128xf32>, vector<1x128xf32> -> vector<1x128xf32>
    %119 = arith.addf %115, %118 : vector<1x128xf32>
    %120 = arith.negf %119 : vector<1x128xf32>
    %121 = math.exp %120 : vector<1x128xf32>
    %cst_43 = arith.constant 1.000000e+00 : f32
    %122 = vector.broadcast %cst_43 : f32 to vector<1x128xf32>
    %123 = arith.addf %122, %121 : vector<1x128xf32>
    %124 = arith.divf %122, %123 : vector<1x128xf32>
    %125 = math.tanh %119 : vector<1x128xf32>
    %126 = vector.extract_strided_slice %124 {offsets = [0, 0], sizes = [1, 32], strides = [1, 1]} : vector<1x128xf32> to vector<1x32xf32>
    %127 = vector.extract_strided_slice %124 {offsets = [0, 32], sizes = [1, 32], strides = [1, 1]} : vector<1x128xf32> to vector<1x32xf32>
    %128 = vector.extract_strided_slice %125 {offsets = [0, 64], sizes = [1, 32], strides = [1, 1]} : vector<1x128xf32> to vector<1x32xf32>
    %129 = vector.extract_strided_slice %124 {offsets = [0, 96], sizes = [1, 32], strides = [1, 1]} : vector<1x128xf32> to vector<1x32xf32>
    %130 = arith.mulf %127, %112 : vector<1x32xf32>
    %131 = arith.mulf %126, %128 : vector<1x32xf32>
    %132 = arith.addf %130, %131 : vector<1x32xf32>
    %133 = math.tanh %132 : vector<1x32xf32>
    %134 = arith.mulf %129, %133 : vector<1x32xf32>
    %135 = vector.extract_strided_slice %30 {offsets = [5, 0], sizes = [1, 128], strides = [1, 1]} : vector<8x128xf32> to vector<1x128xf32>
    %c0_44 = arith.constant 0 : index
    %c0_45 = arith.constant 0 : index
    %c0_46 = arith.constant 0 : index
    %136 = vector.load %arg3[%c0_44, %c0_45, %c0_46] : memref<1x32x128xf32, #tpu.memory_space<vmem>>, vector<1x32x128xf32>
    %137 = vector.shape_cast %136 : vector<1x32x128xf32> to vector<32x128xf32>
    %cst_47 = arith.constant dense<0.000000e+00> : vector<1x128xf32>
    %138 = tpu.matmul %134, %137, %cst_47 {dimension_numbers = #tpu.dot_dimension_numbers<[1], [0], [0], [1], [0, 0, 1, 1], [], []>} : vector<1x32xf32>, vector<32x128xf32>, vector<1x128xf32> -> vector<1x128xf32>
    %139 = arith.addf %135, %138 : vector<1x128xf32>
    %140 = arith.negf %139 : vector<1x128xf32>
    %141 = math.exp %140 : vector<1x128xf32>
    %cst_48 = arith.constant 1.000000e+00 : f32
    %142 = vector.broadcast %cst_48 : f32 to vector<1x128xf32>
    %143 = arith.addf %142, %141 : vector<1x128xf32>
    %144 = arith.divf %142, %143 : vector<1x128xf32>
    %145 = math.tanh %139 : vector<1x128xf32>
    %146 = vector.extract_strided_slice %144 {offsets = [0, 0], sizes = [1, 32], strides = [1, 1]} : vector<1x128xf32> to vector<1x32xf32>
    %147 = vector.extract_strided_slice %144 {offsets = [0, 32], sizes = [1, 32], strides = [1, 1]} : vector<1x128xf32> to vector<1x32xf32>
    %148 = vector.extract_strided_slice %145 {offsets = [0, 64], sizes = [1, 32], strides = [1, 1]} : vector<1x128xf32> to vector<1x32xf32>
    %149 = vector.extract_strided_slice %144 {offsets = [0, 96], sizes = [1, 32], strides = [1, 1]} : vector<1x128xf32> to vector<1x32xf32>
    %150 = arith.mulf %147, %132 : vector<1x32xf32>
    %151 = arith.mulf %146, %148 : vector<1x32xf32>
    %152 = arith.addf %150, %151 : vector<1x32xf32>
    %153 = math.tanh %152 : vector<1x32xf32>
    %154 = arith.mulf %149, %153 : vector<1x32xf32>
    %155 = vector.extract_strided_slice %30 {offsets = [6, 0], sizes = [1, 128], strides = [1, 1]} : vector<8x128xf32> to vector<1x128xf32>
    %c0_49 = arith.constant 0 : index
    %c0_50 = arith.constant 0 : index
    %c0_51 = arith.constant 0 : index
    %156 = vector.load %arg3[%c0_49, %c0_50, %c0_51] : memref<1x32x128xf32, #tpu.memory_space<vmem>>, vector<1x32x128xf32>
    %157 = vector.shape_cast %156 : vector<1x32x128xf32> to vector<32x128xf32>
    %cst_52 = arith.constant dense<0.000000e+00> : vector<1x128xf32>
    %158 = tpu.matmul %154, %157, %cst_52 {dimension_numbers = #tpu.dot_dimension_numbers<[1], [0], [0], [1], [0, 0, 1, 1], [], []>} : vector<1x32xf32>, vector<32x128xf32>, vector<1x128xf32> -> vector<1x128xf32>
    %159 = arith.addf %155, %158 : vector<1x128xf32>
    %160 = arith.negf %159 : vector<1x128xf32>
    %161 = math.exp %160 : vector<1x128xf32>
    %cst_53 = arith.constant 1.000000e+00 : f32
    %162 = vector.broadcast %cst_53 : f32 to vector<1x128xf32>
    %163 = arith.addf %162, %161 : vector<1x128xf32>
    %164 = arith.divf %162, %163 : vector<1x128xf32>
    %165 = math.tanh %159 : vector<1x128xf32>
    %166 = vector.extract_strided_slice %164 {offsets = [0, 0], sizes = [1, 32], strides = [1, 1]} : vector<1x128xf32> to vector<1x32xf32>
    %167 = vector.extract_strided_slice %164 {offsets = [0, 32], sizes = [1, 32], strides = [1, 1]} : vector<1x128xf32> to vector<1x32xf32>
    %168 = vector.extract_strided_slice %165 {offsets = [0, 64], sizes = [1, 32], strides = [1, 1]} : vector<1x128xf32> to vector<1x32xf32>
    %169 = vector.extract_strided_slice %164 {offsets = [0, 96], sizes = [1, 32], strides = [1, 1]} : vector<1x128xf32> to vector<1x32xf32>
    %170 = arith.mulf %167, %152 : vector<1x32xf32>
    %171 = arith.mulf %166, %168 : vector<1x32xf32>
    %172 = arith.addf %170, %171 : vector<1x32xf32>
    %173 = math.tanh %172 : vector<1x32xf32>
    %174 = arith.mulf %169, %173 : vector<1x32xf32>
    %175 = vector.extract_strided_slice %30 {offsets = [7, 0], sizes = [1, 128], strides = [1, 1]} : vector<8x128xf32> to vector<1x128xf32>
    %c0_54 = arith.constant 0 : index
    %c0_55 = arith.constant 0 : index
    %c0_56 = arith.constant 0 : index
    %176 = vector.load %arg3[%c0_54, %c0_55, %c0_56] : memref<1x32x128xf32, #tpu.memory_space<vmem>>, vector<1x32x128xf32>
    %177 = vector.shape_cast %176 : vector<1x32x128xf32> to vector<32x128xf32>
    %cst_57 = arith.constant dense<0.000000e+00> : vector<1x128xf32>
    %178 = tpu.matmul %174, %177, %cst_57 {dimension_numbers = #tpu.dot_dimension_numbers<[1], [0], [0], [1], [0, 0, 1, 1], [], []>} : vector<1x32xf32>, vector<32x128xf32>, vector<1x128xf32> -> vector<1x128xf32>
    %179 = arith.addf %175, %178 : vector<1x128xf32>
    %180 = arith.negf %179 : vector<1x128xf32>
    %181 = math.exp %180 : vector<1x128xf32>
    %cst_58 = arith.constant 1.000000e+00 : f32
    %182 = vector.broadcast %cst_58 : f32 to vector<1x128xf32>
    %183 = arith.addf %182, %181 : vector<1x128xf32>
    %184 = arith.divf %182, %183 : vector<1x128xf32>
    %185 = math.tanh %179 : vector<1x128xf32>
    %186 = vector.extract_strided_slice %184 {offsets = [0, 0], sizes = [1, 32], strides = [1, 1]} : vector<1x128xf32> to vector<1x32xf32>
    %187 = vector.extract_strided_slice %184 {offsets = [0, 32], sizes = [1, 32], strides = [1, 1]} : vector<1x128xf32> to vector<1x32xf32>
    %188 = vector.extract_strided_slice %185 {offsets = [0, 64], sizes = [1, 32], strides = [1, 1]} : vector<1x128xf32> to vector<1x32xf32>
    %189 = vector.extract_strided_slice %184 {offsets = [0, 96], sizes = [1, 32], strides = [1, 1]} : vector<1x128xf32> to vector<1x32xf32>
    %190 = arith.mulf %187, %172 : vector<1x32xf32>
    %191 = arith.mulf %186, %188 : vector<1x32xf32>
    %192 = arith.addf %190, %191 : vector<1x32xf32>
    %193 = math.tanh %192 : vector<1x32xf32>
    %194 = arith.mulf %189, %193 : vector<1x32xf32>
    %195 = tpu.concatenate %54, %74, %94, %114, %134, %154, %174, %194 in 0 : vector<1x32xf32>, vector<1x32xf32>, vector<1x32xf32>, vector<1x32xf32>, vector<1x32xf32>, vector<1x32xf32>, vector<1x32xf32>, vector<1x32xf32> -> vector<8x32xf32>
    %c0_59 = arith.constant 0 : index
    %c0_60 = arith.constant 0 : index
    %196 = vector.load %arg7[%c0_59, %c0_60] : memref<32x128xf32, #tpu.memory_space<vmem>>, vector<32x128xf32>
    %cst_61 = arith.constant dense<0.000000e+00> : vector<8x128xf32>
    %197 = tpu.matmul %195, %196, %cst_61 {dimension_numbers = #tpu.dot_dimension_numbers<[1], [0], [0], [1], [0, 0, 1, 1], [], []>} : vector<8x32xf32>, vector<32x128xf32>, vector<8x128xf32> -> vector<8x128xf32>
    %c0_62 = arith.constant 0 : index
    %c0_63 = arith.constant 0 : index
    %198 = vector.load %arg8[%c0_62, %c0_63] : memref<1x128xf32, #tpu.memory_space<vmem>>, vector<1x128xf32>
    %199 = vector.broadcast %198 : vector<1x128xf32> to vector<8x128xf32>
    %200 = arith.addf %197, %199 : vector<8x128xf32>
    %c0_64 = arith.constant 0 : index
    %c0_65 = arith.constant 0 : index
    %201 = vector.load %arg9[%c0_64, %c0_65] : memref<8x128xf32, #tpu.memory_space<vmem>>, vector<8x128xf32>
    tpu.vector_store %arg9[%c0_64, %c0_65], %200 {strides = array<i32>} : memref<8x128xf32, #tpu.memory_space<vmem>>, vector<8x128xf32>,
    %c0_66 = arith.constant 0 : index
    %c0_67 = arith.constant 0 : index
    %c0_68 = arith.constant 0 : index
    %202 = vector.load %arg10[%c0_66, %c0_67, %c0_68] : memref<1x1x32xf32, #tpu.memory_space<vmem>>, vector<1x1x32xf32>
    %203 = vector.shape_cast %202 : vector<1x1x32xf32> to vector<1x32xf32>
    %204 = vector.shape_cast %194 : vector<1x32xf32> to vector<1x1x32xf32>
    tpu.vector_store %arg10[%c0_66, %c0_67, %c0_68], %204 {strides = array<i32>} : memref<1x1x32xf32, #tpu.memory_space<vmem>>, vector<1x1x32xf32>,
    %c0_69 = arith.constant 0 : index
    %c0_70 = arith.constant 0 : index
    %c0_71 = arith.constant 0 : index
    %205 = vector.load %arg11[%c0_69, %c0_70, %c0_71] : memref<1x1x32xf32, #tpu.memory_space<vmem>>, vector<1x1x32xf32>
    %206 = vector.shape_cast %205 : vector<1x1x32xf32> to vector<1x32xf32>
    %207 = vector.shape_cast %192 : vector<1x32xf32> to vector<1x1x32xf32>
    tpu.vector_store %arg11[%c0_69, %c0_70, %c0_71], %207 {strides = array<i32>} : memref<1x1x32xf32, #tpu.memory_space<vmem>>, vector<1x1x32xf32>,
    return
  }
}

</mosaic_0001>

<llo_original>
// kernel: char_lstm_forward_seq.1
$region0: #{char_lstm_forward_seq.1}
  #allocation0 [shape = 'u32[]', space=smem, size = 0x4, offset = 0x4, fixed_abs, tag = 'smem constant byte address 0x4 - core index']
  #allocation1 [shape = 'u32[144,128]{1,0:T(1,128)}', space=vmem, size = 0x12000, scoped, tag = 'internal scratch']
  %s0 = inlined_call_operand.vmem [shape: s32[8], index: 0, kind: input, shape index: {}]
  %s1 = inlined_call_operand.vmem [shape: f32[16,32], index: 1, kind: input, shape index: {}]
  %s2 = inlined_call_operand.vmem [shape: f32[1,32,128], index: 2, kind: input, shape index: {}]
  %s3 = inlined_call_operand.vmem [shape: f32[1,32,128], index: 3, kind: input, shape index: {}]
  %s4 = inlined_call_operand.vmem [shape: f32[1,128], index: 4, kind: input, shape index: {}]
  %s5 = inlined_call_operand.vmem [shape: f32[1,1,32], index: 5, kind: input, shape index: {}]
  %s6 = inlined_call_operand.vmem [shape: f32[1,1,32], index: 6, kind: input, shape index: {}]
  %s7 = inlined_call_operand.vmem [shape: f32[32,128], index: 7, kind: input, shape index: {}]
  %s8 = inlined_call_operand.vmem [shape: f32[1,128], index: 8, kind: input, shape index: {}]
  %s9 = inlined_call_operand.hbm [shape: f32[8,128], index: 9, kind: output, shape index: {0}]
  %s10 = inlined_call_operand.hbm [shape: f32[1,1,32], index: 10, kind: output, shape index: {1}]
  %s11 = inlined_call_operand.hbm [shape: f32[1,1,32], index: 11, kind: output, shape index: {2}]
  %12 = xla_tuple %s9, %s10, %s11
  %s13 = sld [smem:[#allocation0]]
  $region66: #{char_lstm_forward_seq.1} parent=0
    _
  %s15 = ssub.s32 1, %s13
  %s16 = scalar_select 0, %s15, %s13
  $region1: #{char_lstm_forward_seq.1} parent=0
    #allocation2 [shape = 'u8[512]{0}', space=smem, size = 0x200, scoped, tag = 'input window, operand 0, single buffered']
    #allocation3 [shape = 's32[1]{0}', space=sflag, size = 0x4, scoped, tag = 'scoped memory for char_lstm_forward_seq.1']
    #allocation4 [shape = 's32[1]{0}', space=sflag, size = 0x4, scoped, tag = 'scoped memory for char_lstm_forward_seq.1']
    #allocation5 [shape = 'u8[4096]{0}', space=vmem, size = 0x1000, scoped, tag = 'output window, operand 0, single buffered']
    #allocation6 [shape = 'u8[512]{0}', space=vmem, size = 0x400, scoped, tag = 'output window, operand 1, single buffered']
    #allocation7 [shape = 's32[1]{0}', space=sflag, size = 0x4, scoped, tag = 'scoped memory for char_lstm_forward_seq.1']
    #allocation8 [shape = 'u8[512]{0}', space=vmem, size = 0x400, scoped, tag = 'output window, operand 2, single buffered']
    %17 = vsyncpa [#allocation4], 0
    %18 = vsyncpa [#allocation3], 0
    %19 = vsyncpa [#allocation7], 0
    // Predicated region
    $region2: #{char_lstm_forward_seq.1} parent=1 // pred_check
      _
    $region3: #{char_lstm_forward_seq.1} parent=1 // pred_check_branch
      %21 = sbr.rel (0) target = $region5
    $region4: #{char_lstm_forward_seq.1} parent=1 // pred_region
      %s23 = ssub.s32 16, 16
      %24 = vsyncadd [#allocation4], %s23
      %s26 = sshll.u32 %s0, 4
      %s27 = int_to_ptr.vmem [resolvable:$true] %s26
      %29 = dma.vmem_to_smem %s27, 16, [#allocation2], [#allocation4]
    $region5: #{char_lstm_forward_seq.1} parent=1 // pred_fallthru
      _
    // Predicated region
    $region6: #{char_lstm_forward_seq.1} parent=1 // pred_check
      _
    $region7: #{char_lstm_forward_seq.1} parent=1 // pred_check_branch
      %31 = sbr.rel (0) target = $region9
    $region8: #{char_lstm_forward_seq.1} parent=1 // pred_region
      _
    $region9: #{char_lstm_forward_seq.1} parent=1 // pred_fallthru
      _
    // Predicated region
    $region10: #{char_lstm_forward_seq.1} parent=1 // pred_check
      _
    $region11: #{char_lstm_forward_seq.1} parent=1 // pred_check_branch
      %33 = sbr.rel (0) target = $region13
    $region12: #{char_lstm_forward_seq.1} parent=1 // pred_region
      _
    $region13: #{char_lstm_forward_seq.1} parent=1 // pred_fallthru
      _
    // Predicated region
    $region14: #{char_lstm_forward_seq.1} parent=1 // pred_check
      _
    $region15: #{char_lstm_forward_seq.1} parent=1 // pred_check_branch
      %35 = sbr.rel (0) target = $region17
    $region16: #{char_lstm_forward_seq.1} parent=1 // pred_region
      _
    $region17: #{char_lstm_forward_seq.1} parent=1 // pred_fallthru
      _
    // Predicated region
    $region18: #{char_lstm_forward_seq.1} parent=1 // pred_check
      _
    $region19: #{char_lstm_forward_seq.1} parent=1 // pred_check_branch
      %37 = sbr.rel (0) target = $region21
    $region20: #{char_lstm_forward_seq.1} parent=1 // pred_region
      _
    $region21: #{char_lstm_forward_seq.1} parent=1 // pred_fallthru
      _
    // Predicated region
    $region22: #{char_lstm_forward_seq.1} parent=1 // pred_check
      _
    $region23: #{char_lstm_forward_seq.1} parent=1 // pred_check_branch
      %39 = sbr.rel (0) target = $region25
    $region24: #{char_lstm_forward_seq.1} parent=1 // pred_region
      _
    $region25: #{char_lstm_forward_seq.1} parent=1 // pred_fallthru
      _
    // Predicated region
    $region26: #{char_lstm_forward_seq.1} parent=1 // pred_check
      _
    $region27: #{char_lstm_forward_seq.1} parent=1 // pred_check_branch
      %41 = sbr.rel (0) target = $region29
    $region28: #{char_lstm_forward_seq.1} parent=1 // pred_region
      _
    $region29: #{char_lstm_forward_seq.1} parent=1 // pred_fallthru
      _
    // Predicated region
    $region30: #{char_lstm_forward_seq.1} parent=1 // pred_check
      _
    $region31: #{char_lstm_forward_seq.1} parent=1 // pred_check_branch
      %43 = sbr.rel (0) target = $region33
    $region32: #{char_lstm_forward_seq.1} parent=1 // pred_region
      _
    $region33: #{char_lstm_forward_seq.1} parent=1 // pred_fallthru
      _
    // Predicated region
    $region34: #{char_lstm_forward_seq.1} parent=1 // pred_check
      _
    $region35: #{char_lstm_forward_seq.1} parent=1 // pred_check_branch
      %45 = sbr.rel (0) target = $region37
    $region36: #{char_lstm_forward_seq.1} parent=1 // pred_region
      _
    $region37: #{char_lstm_forward_seq.1} parent=1 // pred_fallthru
      _
    // Predicated region
    $region38: #{char_lstm_forward_seq.1} parent=1 // pred_check
      _
    $region39: #{char_lstm_forward_seq.1} parent=1 // pred_check_branch
      %47 = sbr.rel (0) target = $region41
    $region40: #{char_lstm_forward_seq.1} parent=1 // pred_region
      %48 = dma.done [#allocation4], 16
    $region41: #{char_lstm_forward_seq.1} parent=1 // pred_fallthru
      _
    %49 = sfence
    %s50 = sld [smem:[#allocation2]]
    %s51 = scalar_lea.vmem %s1, %s50
    %v52 = vld [vmem:[%s51] sm:$0x1]
    %s53 = sld [smem:[#allocation2 + $0x1]]
    %s54 = scalar_lea.vmem %s1, %s53
    %v55 = vld [vmem:[%s54] sm:$0x1]
    %s56 = sld [smem:[#allocation2 + $0x2]]
    %s57 = scalar_lea.vmem %s1, %s56
    %v58 = vld [vmem:[%s57] sm:$0x1]
    %s59 = sld [smem:[#allocation2 + $0x3]]
    %s60 = scalar_lea.vmem %s1, %s59
    %v61 = vld [vmem:[%s60] sm:$0x1]
    %s62 = sld [smem:[#allocation2 + $0x4]]
    %s63 = scalar_lea.vmem %s1, %s62
    %v64 = vld [vmem:[%s63] sm:$0x1]
    %s65 = sld [smem:[#allocation2 + $0x5]]
    %s66 = scalar_lea.vmem %s1, %s65
    %v67 = vld [vmem:[%s66] sm:$0x1]
    %s68 = sld [smem:[#allocation2 + $0x6]]
    %s69 = scalar_lea.vmem %s1, %s68
    %v70 = vld [vmem:[%s69] sm:$0x1]
    %s71 = sld [smem:[#allocation2 + $0x7]]
    %s72 = scalar_lea.vmem %s1, %s71
    %v73 = vld [vmem:[%s72] sm:$0x1]
    %v75 = vrot.slane %v55, 7
    %v78 = vrot.slane %v58, 6
    %v81 = vrot.slane %v61, 5
    %v84 = vrot.slane %v64, 4
    %v87 = vrot.slane %v67, 3
    %v90 = vrot.slane %v70, 2
    %v93 = vrot.slane %v73, 1
    %vm95 = vcmask 1040384
    %v96 = vsel %vm95, %v52, %v75
    %vm97 = vcmask 1041408
    %v98 = vsel %vm97, %v96, %v78
    %vm99 = vcmask 1042432
    %v100 = vsel %vm99, %v98, %v81
    %vm101 = vcmask 1043456
    %v102 = vsel %vm101, %v100, %v84
    %vm103 = vcmask 1044480
    %v104 = vsel %vm103, %v102, %v87
    %vm105 = vcmask 1045504
    %v106 = vsel %vm105, %v104, %v90
    %vm107 = vcmask 1046528
    %v108 = vsel %vm107, %v106, %v93
    %v109 = vld [vmem:[%s2] sm:$0xff]
    %v110 = vld [vmem:[%s2 + $0x8] sm:$0xff]
    %v111 = vld [vmem:[%s2 + $0x10] sm:$0xff]
    %v112 = vld [vmem:[%s2 + $0x18] sm:$0xff]
    %v113 = vld [vmem:[%s4] sm:$0x1]
    %v115 = vlaneseq
    %v116 = vshrl.u32 %v115, 7
    %v117 = vsub.s32 0, %v116
    %v118 = vrot.slane %v113, %v117
    %vm120 = vcmask 261120
    %v122 = vsel %vm120, %v108, 0
    %124 = vmatprep.subr.mxu0 0.0
    %125 = vmatpush1.msra.mxu0 %v109
    %126 = vmatprep.subr.mxu0 0.0
    %127 = vmatpush1.msra.mxu0 %v110
    %128 = vmatprep.subr.mxu0 0.0
    %129 = vmatpush1.msra.mxu0 %v111
    %130 = vmatprep.subr.mxu0 0.0
    %131 = vmatpush1.msra.mxu0 %v112
    %132 = vmatprep.subr.mxu0 0.0
    %133 = vmatpush1.msra.mxu0 0.0
    %134 = vmatprep.subr.mxu0 0.0
    %135 = vmatpush1.msra.mxu0 0.0
    %136 = vmatprep.subr.mxu0 0.0
    %137 = vmatpush1.msra.mxu0 0.0
    %138 = vmatprep.subr.mxu0 0.0
    %139 = vmatpush1.msra.mxu0 0.0
    %140 = vmatprep.subr.mxu0 0.0
    %141 = vmatpush1.msra.mxu0 0.0
    %142 = vmatprep.subr.mxu0 0.0
    %143 = vmatpush1.msra.mxu0 0.0
    %144 = vmatprep.subr.mxu0 0.0
    %145 = vmatpush1.msra.mxu0 0.0
    %146 = vmatprep.subr.mxu0 0.0
    %147 = vmatpush1.msra.mxu0 0.0
    %148 = vmatprep.subr.mxu0 0.0
    %149 = vmatpush1.msra.mxu0 0.0
    %150 = vmatprep.subr.mxu0 0.0
    %151 = vmatpush1.msra.mxu0 0.0
    %152 = vmatprep.subr.mxu0 0.0
    %153 = vmatpush1.msra.mxu0 0.0
    %154 = vmatprep.subr.mxu0 0.0
    %155 = vmatpush1.msra.mxu0 0.0
    %156 = vmatprep.subr.mxu0 0.0
    %157 = vmatpush1.msra.mxu0 0.0
    %158 = vmatprep.subr.mxu0 0.0
    %159 = vmatpush1.msra.mxu0 0.0
    %160 = vmatprep.subr.mxu0 0.0
    %161 = vmatpush1.msra.mxu0 0.0
    %162 = vmatprep.subr.mxu0 0.0
    %163 = vmatpush1.msra.mxu0 0.0
    %164 = vmatprep.subr.mxu0 0.0
    %165 = vmatpush1.msra.mxu0 0.0
    %166 = vmatprep.subr.mxu0 0.0
    %167 = vmatpush1.msra.mxu0 0.0
    %168 = vmatprep.subr.mxu0 0.0
    %169 = vmatpush1.msra.mxu0 0.0
    %170 = vmatprep.subr.mxu0 0.0
    %171 = vmatpush1.msra.mxu0 0.0
    %172 = vmatprep.subr.mxu0 0.0
    %173 = vmatpush1.msra.mxu0 0.0
    %174 = vmatprep.subr.mxu0 0.0
    %175 = vmatpush1.msra.mxu0 0.0
    %176 = vmatprep.subr.mxu0 0.0
    %177 = vmatpush1.msra.mxu0 0.0
    %178 = vmatprep.subr.mxu0 0.0
    %179 = vmatpush1.msra.mxu0 0.0
    %180 = vmatprep.subr.mxu0 0.0
    %181 = vmatpush1.msra.mxu0 0.0
    %182 = vmatprep.subr.mxu0 0.0
    %183 = vmatpush1.msra.mxu0 0.0
    %184 = vmatprep.subr.mxu0 0.0
    %185 = vmatpush1.msra.mxu0 0.0
    %186 = vmatprep.subr.mxu0 0.0
    %187 = vmatpush1.msra.mxu0 0.0
    %188 = vmatprep.mubr.f32.mxu0 0.0
    %189 = vmatmul.mubr.f32.gmra.mrb[0].mxu0 %v122
    %v190 = vpop.f32.mrb[0].mxu0
    %v191 = vadd.f32 %v118, %v190
    %v192 = vpop.f32.mrb[0].mxu0
    %193 = vdwg.mxu0
    %v194 = vld [vmem:[%s5] sm:$0x1]
    %v195 = vld [vmem:[%s6] sm:$0x1]
    %v196 = vld [vmem:[%s3] sm:$0xff]
    %v197 = vld [vmem:[%s3 + $0x8] sm:$0xff]
    %v198 = vld [vmem:[%s3 + $0x10] sm:$0xff]
    %v199 = vld [vmem:[%s3 + $0x18] sm:$0xff]
    %v201 = vsel %vm120, %v194, 0
    %203 = vmatprep.subr.mxu0 0.0
    %204 = vmatpush1.msra.mxu0 %v196
    %205 = vmatprep.subr.mxu0 0.0
    %206 = vmatpush1.msra.mxu0 %v197
    %207 = vmatprep.subr.mxu0 0.0
    %208 = vmatpush1.msra.mxu0 %v198
    %209 = vmatprep.subr.mxu0 0.0
    %210 = vmatpush1.msra.mxu0 %v199
    %211 = vmatprep.subr.mxu0 0.0
    %212 = vmatpush1.msra.mxu0 0.0
    %213 = vmatprep.subr.mxu0 0.0
    %214 = vmatpush1.msra.mxu0 0.0
    %215 = vmatprep.subr.mxu0 0.0
    %216 = vmatpush1.msra.mxu0 0.0
    %217 = vmatprep.subr.mxu0 0.0
    %218 = vmatpush1.msra.mxu0 0.0
    %219 = vmatprep.subr.mxu0 0.0
    %220 = vmatpush1.msra.mxu0 0.0
    %221 = vmatprep.subr.mxu0 0.0
    %222 = vmatpush1.msra.mxu0 0.0
    %223 = vmatprep.subr.mxu0 0.0
    %224 = vmatpush1.msra.mxu0 0.0
    %225 = vmatprep.subr.mxu0 0.0
    %226 = vmatpush1.msra.mxu0 0.0
    %227 = vmatprep.subr.mxu0 0.0
    %228 = vmatpush1.msra.mxu0 0.0
    %229 = vmatprep.subr.mxu0 0.0
    %230 = vmatpush1.msra.mxu0 0.0
    %231 = vmatprep.subr.mxu0 0.0
    %232 = vmatpush1.msra.mxu0 0.0
    %233 = vmatprep.subr.mxu0 0.0
    %234 = vmatpush1.msra.mxu0 0.0
    %235 = vmatprep.subr.mxu0 0.0
    %236 = vmatpush1.msra.mxu0 0.0
    %237 = vmatprep.subr.mxu0 0.0
    %238 = vmatpush1.msra.mxu0 0.0
    %239 = vmatprep.subr.mxu0 0.0
    %240 = vmatpush1.msra.mxu0 0.0
    %241 = vmatprep.subr.mxu0 0.0
    %242 = vmatpush1.msra.mxu0 0.0
    %243 = vmatprep.subr.mxu0 0.0
    %244 = vmatpush1.msra.mxu0 0.0
    %245 = vmatprep.subr.mxu0 0.0
    %246 = vmatpush1.msra.mxu0 0.0
    %247 = vmatprep.subr.mxu0 0.0
    %248 = vmatpush1.msra.mxu0 0.0
    %249 = vmatprep.subr.mxu0 0.0
    %250 = vmatpush1.msra.mxu0 0.0
    %251 = vmatprep.subr.mxu0 0.0
    %252 = vmatpush1.msra.mxu0 0.0
    %253 = vmatprep.subr.mxu0 0.0
    %254 = vmatpush1.msra.mxu0 0.0
    %255 = vmatprep.subr.mxu0 0.0
    %256 = vmatpush1.msra.mxu0 0.0
    %257 = vmatprep.subr.mxu0 0.0
    %258 = vmatpush1.msra.mxu0 0.0
    %259 = vmatprep.subr.mxu0 0.0
    %260 = vmatpush1.msra.mxu0 0.0
    %261 = vmatprep.subr.mxu0 0.0
    %262 = vmatpush1.msra.mxu0 0.0
    %263 = vmatprep.subr.mxu0 0.0
    %264 = vmatpush1.msra.mxu0 0.0
    %265 = vmatprep.subr.mxu0 0.0
    %266 = vmatpush1.msra.mxu0 0.0
    %267 = vmatprep.mubr.f32.mxu0 0.0
    %268 = vmatmul.mubr.f32.gmra.mrb[0].mxu0 %v201
    %v269 = vpop.f32.mrb[0].mxu0
    %v270 = vadd.f32 0.0, %v269
    %v271 = vpop.f32.mrb[0].mxu0
    %272 = vdwg.mxu0
    %v273 = vadd.f32 %v191, %v270
    %v274 = vxor.u32 %v273, 2147483648
    %v275 = vmul.f32 %v274, 1.442695
    %v276 = vpow.pop %v275
    %v277 = vadd.f32 %v276, 1.0
    %v278 = vrcp.pop %v277
    %v279 = vmul.f32 1.0, %v278
    %v280 = vtanh.pop %v273
    %v282 = vlaneseq
    %v283 = vshrl.u32 %v282, 7
    %v284 = vsub.s32 0, %v283
    %v285 = vrot.slane %v195, %v284
    %286 = vrot.lane.b32.xlu0 %v285, 32
    %v287 = vpop.permute.xlu0 %286
    %v289 = vmul.f32 %v279, %v287
    %291 = vrot.lane.b32.xlu0 %v280, 64
    %v292 = vpop.permute.xlu0 %291
    %v294 = vmul.f32 %v279, %v292
    %296 = vrot.lane.b32.xlu0 %v294, 32
    %v297 = vpop.permute.xlu0 %296
    %v299 = vadd.f32 %v289, %v297
    %v300 = vtanh.pop %v299
    %302 = vrot.lane.b32.xlu0 %v300, 64
    %v303 = vpop.permute.xlu0 %302
    %v305 = vmul.f32 %v279, %v303
    %307 = vrot.lane.b32.xlu0 %v305, 32
    %v308 = vpop.permute.xlu0 %307
    %v309 = vsel %vm120, %v308, 0
    %311 = vmatprep.subr.mxu0 0.0
    %312 = vmatpush1.msra.mxu0 %v196
    %313 = vmatprep.subr.mxu0 0.0
    %314 = vmatpush1.msra.mxu0 %v197
    %315 = vmatprep.subr.mxu0 0.0
    %316 = vmatpush1.msra.mxu0 %v198
    %317 = vmatprep.subr.mxu0 0.0
    %318 = vmatpush1.msra.mxu0 %v199
    %319 = vmatprep.subr.mxu0 0.0
    %320 = vmatpush1.msra.mxu0 0.0
    %321 = vmatprep.subr.mxu0 0.0
    %322 = vmatpush1.msra.mxu0 0.0
    %323 = vmatprep.subr.mxu0 0.0
    %324 = vmatpush1.msra.mxu0 0.0
    %325 = vmatprep.subr.mxu0 0.0
    %326 = vmatpush1.msra.mxu0 0.0
    %327 = vmatprep.subr.mxu0 0.0
    %328 = vmatpush1.msra.mxu0 0.0
    %329 = vmatprep.subr.mxu0 0.0
    %330 = vmatpush1.msra.mxu0 0.0
    %331 = vmatprep.subr.mxu0 0.0
    %332 = vmatpush1.msra.mxu0 0.0
    %333 = vmatprep.subr.mxu0 0.0
    %334 = vmatpush1.msra.mxu0 0.0
    %335 = vmatprep.subr.mxu0 0.0
    %336 = vmatpush1.msra.mxu0 0.0
    %337 = vmatprep.subr.mxu0 0.0
    %338 = vmatpush1.msra.mxu0 0.0
    %339 = vmatprep.subr.mxu0 0.0
    %340 = vmatpush1.msra.mxu0 0.0
    %341 = vmatprep.subr.mxu0 0.0
    %342 = vmatpush1.msra.mxu0 0.0
    %343 = vmatprep.subr.mxu0 0.0
    %344 = vmatpush1.msra.mxu0 0.0
    %345 = vmatprep.subr.mxu0 0.0
    %346 = vmatpush1.msra.mxu0 0.0
    %347 = vmatprep.subr.mxu0 0.0
    %348 = vmatpush1.msra.mxu0 0.0
    %349 = vmatprep.subr.mxu0 0.0
    %350 = vmatpush1.msra.mxu0 0.0
    %351 = vmatprep.subr.mxu0 0.0
    %352 = vmatpush1.msra.mxu0 0.0
    %353 = vmatprep.subr.mxu0 0.0
    %354 = vmatpush1.msra.mxu0 0.0
    %355 = vmatprep.subr.mxu0 0.0
    %356 = vmatpush1.msra.mxu0 0.0
    %357 = vmatprep.subr.mxu0 0.0
    %358 = vmatpush1.msra.mxu0 0.0
    %359 = vmatprep.subr.mxu0 0.0
    %360 = vmatpush1.msra.mxu0 0.0
    %361 = vmatprep.subr.mxu0 0.0
    %362 = vmatpush1.msra.mxu0 0.0
    %363 = vmatprep.subr.mxu0 0.0
    %364 = vmatpush1.msra.mxu0 0.0
    %365 = vmatprep.subr.mxu0 0.0
    %366 = vmatpush1.msra.mxu0 0.0
    %367 = vmatprep.subr.mxu0 0.0
    %368 = vmatpush1.msra.mxu0 0.0
    %369 = vmatprep.subr.mxu0 0.0
    %370 = vmatpush1.msra.mxu0 0.0
    %371 = vmatprep.subr.mxu0 0.0
    %372 = vmatpush1.msra.mxu0 0.0
    %373 = vmatprep.subr.mxu0 0.0
    %374 = vmatpush1.msra.mxu0 0.0
    %375 = vmatprep.mubr.f32.mxu0 0.0
    %376 = vmatmul.mubr.f32.gmra.mrb[0].mxu0 %v309
    %v377 = vpop.f32.mrb[0].mxu0
    %v378 = vadd.f32 0.0, %v377
    %v379 = vpop.f32.mrb[0].mxu0
    %380 = vdwg.mxu0
    %v382 = vrot.slane %v378, 7
    %v384 = vadd.f32 %v191, %v382
    %v385 = vxor.u32 %v384, 2147483648
    %v386 = vmul.f32 %v385, 1.442695
    %v387 = vpow.pop %v386
    %v388 = vadd.f32 %v387, 1.0
    %v389 = vrcp.pop %v388
    %v390 = vmul.f32 1.0, %v389
    %v391 = vtanh.pop %v384
    %v393 = vrot.slane %v299, 7
    %v395 = vmul.f32 %v390, %v393
    %397 = vrot.lane.b32.xlu0 %v391, 64
    %v398 = vpop.permute.xlu0 %397
    %v400 = vmul.f32 %v390, %v398
    %402 = vrot.lane.b32.xlu0 %v400, 32
    %v403 = vpop.permute.xlu0 %402
    %v405 = vadd.f32 %v395, %v403
    %v406 = vtanh.pop %v405
    %408 = vrot.lane.b32.xlu0 %v406, 64
    %v409 = vpop.permute.xlu0 %408
    %v411 = vmul.f32 %v390, %v409
    %v413 = vrot.slane %v411, 1
    %414 = vrot.lane.b32.xlu0 %v413, 32
    %v415 = vpop.permute.xlu0 %414
    %v416 = vsel %vm120, %v415, 0
    %418 = vmatprep.subr.mxu0 0.0
    %419 = vmatpush1.msra.mxu0 %v196
    %420 = vmatprep.subr.mxu0 0.0
    %421 = vmatpush1.msra.mxu0 %v197
    %422 = vmatprep.subr.mxu0 0.0
    %423 = vmatpush1.msra.mxu0 %v198
    %424 = vmatprep.subr.mxu0 0.0
    %425 = vmatpush1.msra.mxu0 %v199
    %426 = vmatprep.subr.mxu0 0.0
    %427 = vmatpush1.msra.mxu0 0.0
    %428 = vmatprep.subr.mxu0 0.0
    %429 = vmatpush1.msra.mxu0 0.0
    %430 = vmatprep.subr.mxu0 0.0
    %431 = vmatpush1.msra.mxu0 0.0
    %432 = vmatprep.subr.mxu0 0.0
    %433 = vmatpush1.msra.mxu0 0.0
    %434 = vmatprep.subr.mxu0 0.0
    %435 = vmatpush1.msra.mxu0 0.0
    %436 = vmatprep.subr.mxu0 0.0
    %437 = vmatpush1.msra.mxu0 0.0
    %438 = vmatprep.subr.mxu0 0.0
    %439 = vmatpush1.msra.mxu0 0.0
    %440 = vmatprep.subr.mxu0 0.0
    %441 = vmatpush1.msra.mxu0 0.0
    %442 = vmatprep.subr.mxu0 0.0
    %443 = vmatpush1.msra.mxu0 0.0
    %444 = vmatprep.subr.mxu0 0.0
    %445 = vmatpush1.msra.mxu0 0.0
    %446 = vmatprep.subr.mxu0 0.0
    %447 = vmatpush1.msra.mxu0 0.0
    %448 = vmatprep.subr.mxu0 0.0
    %449 = vmatpush1.msra.mxu0 0.0
    %450 = vmatprep.subr.mxu0 0.0
    %451 = vmatpush1.msra.mxu0 0.0
    %452 = vmatprep.subr.mxu0 0.0
    %453 = vmatpush1.msra.mxu0 0.0
    %454 = vmatprep.subr.mxu0 0.0
    %455 = vmatpush1.msra.mxu0 0.0
    %456 = vmatprep.subr.mxu0 0.0
    %457 = vmatpush1.msra.mxu0 0.0
    %458 = vmatprep.subr.mxu0 0.0
    %459 = vmatpush1.msra.mxu0 0.0
    %460 = vmatprep.subr.mxu0 0.0
    %461 = vmatpush1.msra.mxu0 0.0
    %462 = vmatprep.subr.mxu0 0.0
    %463 = vmatpush1.msra.mxu0 0.0
    %464 = vmatprep.subr.mxu0 0.0
    %465 = vmatpush1.msra.mxu0 0.0
    %466 = vmatprep.subr.mxu0 0.0
    %467 = vmatpush1.msra.mxu0 0.0
    %468 = vmatprep.subr.mxu0 0.0
    %469 = vmatpush1.msra.mxu0 0.0
    %470 = vmatprep.subr.mxu0 0.0
    %471 = vmatpush1.msra.mxu0 0.0
    %472 = vmatprep.subr.mxu0 0.0
    %473 = vmatpush1.msra.mxu0 0.0
    %474 = vmatprep.subr.mxu0 0.0
    %475 = vmatpush1.msra.mxu0 0.0
    %476 = vmatprep.subr.mxu0 0.0
    %477 = vmatpush1.msra.mxu0 0.0
    %478 = vmatprep.subr.mxu0 0.0
    %479 = vmatpush1.msra.mxu0 0.0
    %480 = vmatprep.subr.mxu0 0.0
    %481 = vmatpush1.msra.mxu0 0.0
    %482 = vmatprep.mubr.f32.mxu0 0.0
    %483 = vmatmul.mubr.f32.gmra.mrb[0].mxu0 %v416
    %v484 = vpop.f32.mrb[0].mxu0
    %v485 = vadd.f32 0.0, %v484
    %v486 = vpop.f32.mrb[0].mxu0
    %487 = vdwg.mxu0
    %v489 = vrot.slane %v485, 6
    %v491 = vadd.f32 %v191, %v489
    %v492 = vxor.u32 %v491, 2147483648
    %v493 = vmul.f32 %v492, 1.442695
    %v494 = vpow.pop %v493
    %v495 = vadd.f32 %v494, 1.0
    %v496 = vrcp.pop %v495
    %v497 = vmul.f32 1.0, %v496
    %v498 = vtanh.pop %v491
    %v500 = vrot.slane %v405, 7
    %v502 = vmul.f32 %v497, %v500
    %504 = vrot.lane.b32.xlu0 %v498, 64
    %v505 = vpop.permute.xlu0 %504
    %v507 = vmul.f32 %v497, %v505
    %509 = vrot.lane.b32.xlu0 %v507, 32
    %v510 = vpop.permute.xlu0 %509
    %v512 = vadd.f32 %v502, %v510
    %v513 = vtanh.pop %v512
    %515 = vrot.lane.b32.xlu0 %v513, 64
    %v516 = vpop.permute.xlu0 %515
    %v518 = vmul.f32 %v497, %v516
    %v520 = vrot.slane %v518, 2
    %521 = vrot.lane.b32.xlu0 %v520, 32
    %v522 = vpop.permute.xlu0 %521
    %v523 = vsel %vm120, %v522, 0
    %525 = vmatprep.subr.mxu0 0.0
    %526 = vmatpush1.msra.mxu0 %v196
    %527 = vmatprep.subr.mxu0 0.0
    %528 = vmatpush1.msra.mxu0 %v197
    %529 = vmatprep.subr.mxu0 0.0
    %530 = vmatpush1.msra.mxu0 %v198
    %531 = vmatprep.subr.mxu0 0.0
    %532 = vmatpush1.msra.mxu0 %v199
    %533 = vmatprep.subr.mxu0 0.0
    %534 = vmatpush1.msra.mxu0 0.0
    %535 = vmatprep.subr.mxu0 0.0
    %536 = vmatpush1.msra.mxu0 0.0
    %537 = vmatprep.subr.mxu0 0.0
    %538 = vmatpush1.msra.mxu0 0.0
    %539 = vmatprep.subr.mxu0 0.0
    %540 = vmatpush1.msra.mxu0 0.0
    %541 = vmatprep.subr.mxu0 0.0
    %542 = vmatpush1.msra.mxu0 0.0
    %543 = vmatprep.subr.mxu0 0.0
    %544 = vmatpush1.msra.mxu0 0.0
    %545 = vmatprep.subr.mxu0 0.0
    %546 = vmatpush1.msra.mxu0 0.0
    %547 = vmatprep.subr.mxu0 0.0
    %548 = vmatpush1.msra.mxu0 0.0
    %549 = vmatprep.subr.mxu0 0.0
    %550 = vmatpush1.msra.mxu0 0.0
    %551 = vmatprep.subr.mxu0 0.0
    %552 = vmatpush1.msra.mxu0 0.0
    %553 = vmatprep.subr.mxu0 0.0
    %554 = vmatpush1.msra.mxu0 0.0
    %555 = vmatprep.subr.mxu0 0.0
    %556 = vmatpush1.msra.mxu0 0.0
    %557 = vmatprep.subr.mxu0 0.0
    %558 = vmatpush1.msra.mxu0 0.0
    %559 = vmatprep.subr.mxu0 0.0
    %560 = vmatpush1.msra.mxu0 0.0
    %561 = vmatprep.subr.mxu0 0.0
    %562 = vmatpush1.msra.mxu0 0.0
    %563 = vmatprep.subr.mxu0 0.0
    %564 = vmatpush1.msra.mxu0 0.0
    %565 = vmatprep.subr.mxu0 0.0
    %566 = vmatpush1.msra.mxu0 0.0
    %567 = vmatprep.subr.mxu0 0.0
    %568 = vmatpush1.msra.mxu0 0.0
    %569 = vmatprep.subr.mxu0 0.0
    %570 = vmatpush1.msra.mxu0 0.0
    %571 = vmatprep.subr.mxu0 0.0
    %572 = vmatpush1.msra.mxu0 0.0
    %573 = vmatprep.subr.mxu0 0.0
    %574 = vmatpush1.msra.mxu0 0.0
    %575 = vmatprep.subr.mxu0 0.0
    %576 = vmatpush1.msra.mxu0 0.0
    %577 = vmatprep.subr.mxu0 0.0
    %578 = vmatpush1.msra.mxu0 0.0
    %579 = vmatprep.subr.mxu0 0.0
    %580 = vmatpush1.msra.mxu0 0.0
    %581 = vmatprep.subr.mxu0 0.0
    %582 = vmatpush1.msra.mxu0 0.0
    %583 = vmatprep.subr.mxu0 0.0
    %584 = vmatpush1.msra.mxu0 0.0
    %585 = vmatprep.subr.mxu0 0.0
    %586 = vmatpush1.msra.mxu0 0.0
    %587 = vmatprep.subr.mxu0 0.0
    %588 = vmatpush1.msra.mxu0 0.0
    %589 = vmatprep.mubr.f32.mxu0 0.0
    %590 = vmatmul.mubr.f32.gmra.mrb[0].mxu0 %v523
    %v591 = vpop.f32.mrb[0].mxu0
    %v592 = vadd.f32 0.0, %v591
    %v593 = vpop.f32.mrb[0].mxu0
    %594 = vdwg.mxu0
    %v596 = vrot.slane %v592, 5
    %v598 = vadd.f32 %v191, %v596
    %v599 = vxor.u32 %v598, 2147483648
    %v600 = vmul.f32 %v599, 1.442695
    %v601 = vpow.pop %v600
    %v602 = vadd.f32 %v601, 1.0
    %v603 = vrcp.pop %v602
    %v604 = vmul.f32 1.0, %v603
    %v605 = vtanh.pop %v598
    %v607 = vrot.slane %v512, 7
    %v609 = vmul.f32 %v604, %v607
    %611 = vrot.lane.b32.xlu0 %v605, 64
    %v612 = vpop.permute.xlu0 %611
    %v614 = vmul.f32 %v604, %v612
    %616 = vrot.lane.b32.xlu0 %v614, 32
    %v617 = vpop.permute.xlu0 %616
    %v619 = vadd.f32 %v609, %v617
    %v620 = vtanh.pop %v619
    %622 = vrot.lane.b32.xlu0 %v620, 64
    %v623 = vpop.permute.xlu0 %622
    %v625 = vmul.f32 %v604, %v623
    %v627 = vrot.slane %v625, 3
    %628 = vrot.lane.b32.xlu0 %v627, 32
    %v629 = vpop.permute.xlu0 %628
    %v630 = vsel %vm120, %v629, 0
    %632 = vmatprep.subr.mxu0 0.0
    %633 = vmatpush1.msra.mxu0 %v196
    %634 = vmatprep.subr.mxu0 0.0
    %635 = vmatpush1.msra.mxu0 %v197
    %636 = vmatprep.subr.mxu0 0.0
    %637 = vmatpush1.msra.mxu0 %v198
    %638 = vmatprep.subr.mxu0 0.0
    %639 = vmatpush1.msra.mxu0 %v199
    %640 = vmatprep.subr.mxu0 0.0
    %641 = vmatpush1.msra.mxu0 0.0
    %642 = vmatprep.subr.mxu0 0.0
    %643 = vmatpush1.msra.mxu0 0.0
    %644 = vmatprep.subr.mxu0 0.0
    %645 = vmatpush1.msra.mxu0 0.0
    %646 = vmatprep.subr.mxu0 0.0
    %647 = vmatpush1.msra.mxu0 0.0
    %648 = vmatprep.subr.mxu0 0.0
    %649 = vmatpush1.msra.mxu0 0.0
    %650 = vmatprep.subr.mxu0 0.0
    %651 = vmatpush1.msra.mxu0 0.0
    %652 = vmatprep.subr.mxu0 0.0
    %653 = vmatpush1.msra.mxu0 0.0
    %654 = vmatprep.subr.mxu0 0.0
    %655 = vmatpush1.msra.mxu0 0.0
    %656 = vmatprep.subr.mxu0 0.0
    %657 = vmatpush1.msra.mxu0 0.0
    %658 = vmatprep.subr.mxu0 0.0
    %659 = vmatpush1.msra.mxu0 0.0
    %660 = vmatprep.subr.mxu0 0.0
    %661 = vmatpush1.msra.mxu0 0.0
    %662 = vmatprep.subr.mxu0 0.0
    %663 = vmatpush1.msra.mxu0 0.0
    %664 = vmatprep.subr.mxu0 0.0
    %665 = vmatpush1.msra.mxu0 0.0
    %666 = vmatprep.subr.mxu0 0.0
    %667 = vmatpush1.msra.mxu0 0.0
    %668 = vmatprep.subr.mxu0 0.0
    %669 = vmatpush1.msra.mxu0 0.0
    %670 = vmatprep.subr.mxu0 0.0
    %671 = vmatpush1.msra.mxu0 0.0
    %672 = vmatprep.subr.mxu0 0.0
    %673 = vmatpush1.msra.mxu0 0.0
    %674 = vmatprep.subr.mxu0 0.0
    %675 = vmatpush1.msra.mxu0 0.0
    %676 = vmatprep.subr.mxu0 0.0
    %677 = vmatpush1.msra.mxu0 0.0
    %678 = vmatprep.subr.mxu0 0.0
    %679 = vmatpush1.msra.mxu0 0.0
    %680 = vmatprep.subr.mxu0 0.0
    %681 = vmatpush1.msra.mxu0 0.0
    %682 = vmatprep.subr.mxu0 0.0
    %683 = vmatpush1.msra.mxu0 0.0
    %684 = vmatprep.subr.mxu0 0.0
    %685 = vmatpush1.msra.mxu0 0.0
    %686 = vmatprep.subr.mxu0 0.0
    %687 = vmatpush1.msra.mxu0 0.0
    %688 = vmatprep.subr.mxu0 0.0
    %689 = vmatpush1.msra.mxu0 0.0
    %690 = vmatprep.subr.mxu0 0.0
    %691 = vmatpush1.msra.mxu0 0.0
    %692 = vmatprep.subr.mxu0 0.0
    %693 = vmatpush1.msra.mxu0 0.0
    %694 = vmatprep.subr.mxu0 0.0
    %695 = vmatpush1.msra.mxu0 0.0
    %696 = vmatprep.mubr.f32.mxu0 0.0
    %697 = vmatmul.mubr.f32.gmra.mrb[0].mxu0 %v630
    %v698 = vpop.f32.mrb[0].mxu0
    %v699 = vadd.f32 0.0, %v698
    %v700 = vpop.f32.mrb[0].mxu0
    %701 = vdwg.mxu0
    %v703 = vrot.slane %v699, 4
    %v705 = vadd.f32 %v191, %v703
    %v706 = vxor.u32 %v705, 2147483648
    %v707 = vmul.f32 %v706, 1.442695
    %v708 = vpow.pop %v707
    %v709 = vadd.f32 %v708, 1.0
    %v710 = vrcp.pop %v709
    %v711 = vmul.f32 1.0, %v710
    %v712 = vtanh.pop %v705
    %v714 = vrot.slane %v619, 7
    %v716 = vmul.f32 %v711, %v714
    %718 = vrot.lane.b32.xlu0 %v712, 64
    %v719 = vpop.permute.xlu0 %718
    %v721 = vmul.f32 %v711, %v719
    %723 = vrot.lane.b32.xlu0 %v721, 32
    %v724 = vpop.permute.xlu0 %723
    %v726 = vadd.f32 %v716, %v724
    %v727 = vtanh.pop %v726
    %729 = vrot.lane.b32.xlu0 %v727, 64
    %v730 = vpop.permute.xlu0 %729
    %v732 = vmul.f32 %v711, %v730
    %v734 = vrot.slane %v732, 4
    %735 = vrot.lane.b32.xlu0 %v734, 32
    %v736 = vpop.permute.xlu0 %735
    %v737 = vsel %vm120, %v736, 0
    %739 = vmatprep.subr.mxu0 0.0
    %740 = vmatpush1.msra.mxu0 %v196
    %741 = vmatprep.subr.mxu0 0.0
    %742 = vmatpush1.msra.mxu0 %v197
    %743 = vmatprep.subr.mxu0 0.0
    %744 = vmatpush1.msra.mxu0 %v198
    %745 = vmatprep.subr.mxu0 0.0
    %746 = vmatpush1.msra.mxu0 %v199
    %747 = vmatprep.subr.mxu0 0.0
    %748 = vmatpush1.msra.mxu0 0.0
    %749 = vmatprep.subr.mxu0 0.0
    %750 = vmatpush1.msra.mxu0 0.0
    %751 = vmatprep.subr.mxu0 0.0
    %752 = vmatpush1.msra.mxu0 0.0
    %753 = vmatprep.subr.mxu0 0.0
    %754 = vmatpush1.msra.mxu0 0.0
    %755 = vmatprep.subr.mxu0 0.0
    %756 = vmatpush1.msra.mxu0 0.0
    %757 = vmatprep.subr.mxu0 0.0
    %758 = vmatpush1.msra.mxu0 0.0
    %759 = vmatprep.subr.mxu0 0.0
    %760 = vmatpush1.msra.mxu0 0.0
    %761 = vmatprep.subr.mxu0 0.0
    %762 = vmatpush1.msra.mxu0 0.0
    %763 = vmatprep.subr.mxu0 0.0
    %764 = vmatpush1.msra.mxu0 0.0
    %765 = vmatprep.subr.mxu0 0.0
    %766 = vmatpush1.msra.mxu0 0.0
    %767 = vmatprep.subr.mxu0 0.0
    %768 = vmatpush1.msra.mxu0 0.0
    %769 = vmatprep.subr.mxu0 0.0
    %770 = vmatpush1.msra.mxu0 0.0
    %771 = vmatprep.subr.mxu0 0.0
    %772 = vmatpush1.msra.mxu0 0.0
    %773 = vmatprep.subr.mxu0 0.0
    %774 = vmatpush1.msra.mxu0 0.0
    %775 = vmatprep.subr.mxu0 0.0
    %776 = vmatpush1.msra.mxu0 0.0
    %777 = vmatprep.subr.mxu0 0.0
    %778 = vmatpush1.msra.mxu0 0.0
    %779 = vmatprep.subr.mxu0 0.0
    %780 = vmatpush1.msra.mxu0 0.0
    %781 = vmatprep.subr.mxu0 0.0
    %782 = vmatpush1.msra.mxu0 0.0
    %783 = vmatprep.subr.mxu0 0.0
    %784 = vmatpush1.msra.mxu0 0.0
    %785 = vmatprep.subr.mxu0 0.0
    %786 = vmatpush1.msra.mxu0 0.0
    %787 = vmatprep.subr.mxu0 0.0
    %788 = vmatpush1.msra.mxu0 0.0
    %789 = vmatprep.subr.mxu0 0.0
    %790 = vmatpush1.msra.mxu0 0.0
    %791 = vmatprep.subr.mxu0 0.0
    %792 = vmatpush1.msra.mxu0 0.0
    %793 = vmatprep.subr.mxu0 0.0
    %794 = vmatpush1.msra.mxu0 0.0
    %795 = vmatprep.subr.mxu0 0.0
    %796 = vmatpush1.msra.mxu0 0.0
    %797 = vmatprep.subr.mxu0 0.0
    %798 = vmatpush1.msra.mxu0 0.0
    %799 = vmatprep.subr.mxu0 0.0
    %800 = vmatpush1.msra.mxu0 0.0
    %801 = vmatprep.subr.mxu0 0.0
    %802 = vmatpush1.msra.mxu0 0.0
    %803 = vmatprep.mubr.f32.mxu0 0.0
    %804 = vmatmul.mubr.f32.gmra.mrb[0].mxu0 %v737
    %v805 = vpop.f32.mrb[0].mxu0
    %v806 = vadd.f32 0.0, %v805
    %v807 = vpop.f32.mrb[0].mxu0
    %808 = vdwg.mxu0
    %v810 = vrot.slane %v806, 3
    %v812 = vadd.f32 %v191, %v810
    %v813 = vxor.u32 %v812, 2147483648
    %v814 = vmul.f32 %v813, 1.442695
    %v815 = vpow.pop %v814
    %v816 = vadd.f32 %v815, 1.0
    %v817 = vrcp.pop %v816
    %v818 = vmul.f32 1.0, %v817
    %v819 = vtanh.pop %v812
    %v821 = vrot.slane %v726, 7
    %v823 = vmul.f32 %v818, %v821
    %825 = vrot.lane.b32.xlu0 %v819, 64
    %v826 = vpop.permute.xlu0 %825
    %v828 = vmul.f32 %v818, %v826
    %830 = vrot.lane.b32.xlu0 %v828, 32
    %v831 = vpop.permute.xlu0 %830
    %v833 = vadd.f32 %v823, %v831
    %v834 = vtanh.pop %v833
    %836 = vrot.lane.b32.xlu0 %v834, 64
    %v837 = vpop.permute.xlu0 %836
    %v839 = vmul.f32 %v818, %v837
    %v841 = vrot.slane %v839, 5
    %842 = vrot.lane.b32.xlu0 %v841, 32
    %v843 = vpop.permute.xlu0 %842
    %v844 = vsel %vm120, %v843, 0
    %846 = vmatprep.subr.mxu0 0.0
    %847 = vmatpush1.msra.mxu0 %v196
    %848 = vmatprep.subr.mxu0 0.0
    %849 = vmatpush1.msra.mxu0 %v197
    %850 = vmatprep.subr.mxu0 0.0
    %851 = vmatpush1.msra.mxu0 %v198
    %852 = vmatprep.subr.mxu0 0.0
    %853 = vmatpush1.msra.mxu0 %v199
    %854 = vmatprep.subr.mxu0 0.0
    %855 = vmatpush1.msra.mxu0 0.0
    %856 = vmatprep.subr.mxu0 0.0
    %857 = vmatpush1.msra.mxu0 0.0
    %858 = vmatprep.subr.mxu0 0.0
    %859 = vmatpush1.msra.mxu0 0.0
    %860 = vmatprep.subr.mxu0 0.0
    %861 = vmatpush1.msra.mxu0 0.0
    %862 = vmatprep.subr.mxu0 0.0
    %863 = vmatpush1.msra.mxu0 0.0
    %864 = vmatprep.subr.mxu0 0.0
    %865 = vmatpush1.msra.mxu0 0.0
    %866 = vmatprep.subr.mxu0 0.0
    %867 = vmatpush1.msra.mxu0 0.0
    %868 = vmatprep.subr.mxu0 0.0
    %869 = vmatpush1.msra.mxu0 0.0
    %870 = vmatprep.subr.mxu0 0.0
    %871 = vmatpush1.msra.mxu0 0.0
    %872 = vmatprep.subr.mxu0 0.0
    %873 = vmatpush1.msra.mxu0 0.0
    %874 = vmatprep.subr.mxu0 0.0
    %875 = vmatpush1.msra.mxu0 0.0
    %876 = vmatprep.subr.mxu0 0.0
    %877 = vmatpush1.msra.mxu0 0.0
    %878 = vmatprep.subr.mxu0 0.0
    %879 = vmatpush1.msra.mxu0 0.0
    %880 = vmatprep.subr.mxu0 0.0
    %881 = vmatpush1.msra.mxu0 0.0
    %882 = vmatprep.subr.mxu0 0.0
    %883 = vmatpush1.msra.mxu0 0.0
    %884 = vmatprep.subr.mxu0 0.0
    %885 = vmatpush1.msra.mxu0 0.0
    %886 = vmatprep.subr.mxu0 0.0
    %887 = vmatpush1.msra.mxu0 0.0
    %888 = vmatprep.subr.mxu0 0.0
    %889 = vmatpush1.msra.mxu0 0.0
    %890 = vmatprep.subr.mxu0 0.0
    %891 = vmatpush1.msra.mxu0 0.0
    %892 = vmatprep.subr.mxu0 0.0
    %893 = vmatpush1.msra.mxu0 0.0
    %894 = vmatprep.subr.mxu0 0.0
    %895 = vmatpush1.msra.mxu0 0.0
    %896 = vmatprep.subr.mxu0 0.0
    %897 = vmatpush1.msra.mxu0 0.0
    %898 = vmatprep.subr.mxu0 0.0
    %899 = vmatpush1.msra.mxu0 0.0
    %900 = vmatprep.subr.mxu0 0.0
    %901 = vmatpush1.msra.mxu0 0.0
    %902 = vmatprep.subr.mxu0 0.0
    %903 = vmatpush1.msra.mxu0 0.0
    %904 = vmatprep.subr.mxu0 0.0
    %905 = vmatpush1.msra.mxu0 0.0
    %906 = vmatprep.subr.mxu0 0.0
    %907 = vmatpush1.msra.mxu0 0.0
    %908 = vmatprep.subr.mxu0 0.0
    %909 = vmatpush1.msra.mxu0 0.0
    %910 = vmatprep.mubr.f32.mxu0 0.0
    %911 = vmatmul.mubr.f32.gmra.mrb[0].mxu0 %v844
    %v912 = vpop.f32.mrb[0].mxu0
    %v913 = vadd.f32 0.0, %v912
    %v914 = vpop.f32.mrb[0].mxu0
    %915 = vdwg.mxu0
    %v917 = vrot.slane %v913, 2
    %v919 = vadd.f32 %v191, %v917
    %v920 = vxor.u32 %v919, 2147483648
    %v921 = vmul.f32 %v920, 1.442695
    %v922 = vpow.pop %v921
    %v923 = vadd.f32 %v922, 1.0
    %v924 = vrcp.pop %v923
    %v925 = vmul.f32 1.0, %v924
    %v926 = vtanh.pop %v919
    %v928 = vrot.slane %v833, 7
    %v930 = vmul.f32 %v925, %v928
    %932 = vrot.lane.b32.xlu0 %v926, 64
    %v933 = vpop.permute.xlu0 %932
    %v935 = vmul.f32 %v925, %v933
    %937 = vrot.lane.b32.xlu0 %v935, 32
    %v938 = vpop.permute.xlu0 %937
    %v940 = vadd.f32 %v930, %v938
    %v941 = vtanh.pop %v940
    %943 = vrot.lane.b32.xlu0 %v941, 64
    %v944 = vpop.permute.xlu0 %943
    %v946 = vmul.f32 %v925, %v944
    %v948 = vrot.slane %v946, 6
    %949 = vrot.lane.b32.xlu0 %v948, 32
    %v950 = vpop.permute.xlu0 %949
    %v951 = vsel %vm120, %v950, 0
    %953 = vmatprep.subr.mxu0 0.0
    %954 = vmatpush1.msra.mxu0 %v196
    %955 = vmatprep.subr.mxu0 0.0
    %956 = vmatpush1.msra.mxu0 %v197
    %957 = vmatprep.subr.mxu0 0.0
    %958 = vmatpush1.msra.mxu0 %v198
    %959 = vmatprep.subr.mxu0 0.0
    %960 = vmatpush1.msra.mxu0 %v199
    %961 = vmatprep.subr.mxu0 0.0
    %962 = vmatpush1.msra.mxu0 0.0
    %963 = vmatprep.subr.mxu0 0.0
    %964 = vmatpush1.msra.mxu0 0.0
    %965 = vmatprep.subr.mxu0 0.0
    %966 = vmatpush1.msra.mxu0 0.0
    %967 = vmatprep.subr.mxu0 0.0
    %968 = vmatpush1.msra.mxu0 0.0
    %969 = vmatprep.subr.mxu0 0.0
    %970 = vmatpush1.msra.mxu0 0.0
    %971 = vmatprep.subr.mxu0 0.0
    %972 = vmatpush1.msra.mxu0 0.0
    %973 = vmatprep.subr.mxu0 0.0
    %974 = vmatpush1.msra.mxu0 0.0
    %975 = vmatprep.subr.mxu0 0.0
    %976 = vmatpush1.msra.mxu0 0.0
    %977 = vmatprep.subr.mxu0 0.0
    %978 = vmatpush1.msra.mxu0 0.0
    %979 = vmatprep.subr.mxu0 0.0
    %980 = vmatpush1.msra.mxu0 0.0
    %981 = vmatprep.subr.mxu0 0.0
    %982 = vmatpush1.msra.mxu0 0.0
    %983 = vmatprep.subr.mxu0 0.0
    %984 = vmatpush1.msra.mxu0 0.0
    %985 = vmatprep.subr.mxu0 0.0
    %986 = vmatpush1.msra.mxu0 0.0
    %987 = vmatprep.subr.mxu0 0.0
    %988 = vmatpush1.msra.mxu0 0.0
    %989 = vmatprep.subr.mxu0 0.0
    %990 = vmatpush1.msra.mxu0 0.0
    %991 = vmatprep.subr.mxu0 0.0
    %992 = vmatpush1.msra.mxu0 0.0
    %993 = vmatprep.subr.mxu0 0.0
    %994 = vmatpush1.msra.mxu0 0.0
    %995 = vmatprep.subr.mxu0 0.0
    %996 = vmatpush1.msra.mxu0 0.0
    %997 = vmatprep.subr.mxu0 0.0
    %998 = vmatpush1.msra.mxu0 0.0
    %999 = vmatprep.subr.mxu0 0.0
    %1000 = vmatpush1.msra.mxu0 0.0
    %1001 = vmatprep.subr.mxu0 0.0
    %1002 = vmatpush1.msra.mxu0 0.0
    %1003 = vmatprep.subr.mxu0 0.0
    %1004 = vmatpush1.msra.mxu0 0.0
    %1005 = vmatprep.subr.mxu0 0.0
    %1006 = vmatpush1.msra.mxu0 0.0
    %1007 = vmatprep.subr.mxu0 0.0
    %1008 = vmatpush1.msra.mxu0 0.0
    %1009 = vmatprep.subr.mxu0 0.0
    %1010 = vmatpush1.msra.mxu0 0.0
    %1011 = vmatprep.subr.mxu0 0.0
    %1012 = vmatpush1.msra.mxu0 0.0
    %1013 = vmatprep.subr.mxu0 0.0
    %1014 = vmatpush1.msra.mxu0 0.0
    %1015 = vmatprep.subr.mxu0 0.0
    %1016 = vmatpush1.msra.mxu0 0.0
    %1017 = vmatprep.mubr.f32.mxu0 0.0
    %1018 = vmatmul.mubr.f32.gmra.mrb[0].mxu0 %v951
    %v1019 = vpop.f32.mrb[0].mxu0
    %v1020 = vadd.f32 0.0, %v1019
    %v1021 = vpop.f32.mrb[0].mxu0
    %1022 = vdwg.mxu0
    %v1024 = vrot.slane %v1020, 1
    %v1026 = vadd.f32 %v191, %v1024
    %v1027 = vxor.u32 %v1026, 2147483648
    %v1028 = vmul.f32 %v1027, 1.442695
    %v1029 = vpow.pop %v1028
    %v1030 = vadd.f32 %v1029, 1.0
    %v1031 = vrcp.pop %v1030
    %v1032 = vmul.f32 1.0, %v1031
    %v1033 = vtanh.pop %v1026
    %v1035 = vrot.slane %v940, 7
    %v1037 = vmul.f32 %v1032, %v1035
    %1039 = vrot.lane.b32.xlu0 %v1033, 64
    %v1040 = vpop.permute.xlu0 %1039
    %v1042 = vmul.f32 %v1032, %v1040
    %1044 = vrot.lane.b32.xlu0 %v1042, 32
    %v1045 = vpop.permute.xlu0 %1044
    %v1047 = vadd.f32 %v1037, %v1045
    %v1048 = vtanh.pop %v1047
    %1050 = vrot.lane.b32.xlu0 %v1048, 64
    %v1051 = vpop.permute.xlu0 %1050
    %v1053 = vmul.f32 %v1032, %v1051
    %v1054 = vsel %vm95, %v305, %v411
    %v1055 = vsel %vm97, %v1054, %v518
    %v1056 = vsel %vm99, %v1055, %v625
    %v1057 = vsel %vm101, %v1056, %v732
    %v1058 = vsel %vm103, %v1057, %v839
    %v1059 = vsel %vm105, %v1058, %v946
    %v1060 = vsel %vm107, %v1059, %v1053
    %v1061 = vld [vmem:[%s7] sm:$0xff]
    %v1062 = vld [vmem:[%s7 + $0x8] sm:$0xff]
    %v1063 = vld [vmem:[%s7 + $0x10] sm:$0xff]
    %v1064 = vld [vmem:[%s7 + $0x18] sm:$0xff]
    %v1065 = vld [vmem:[%s8] sm:$0x1]
    %v1067 = vlaneseq
    %v1068 = vshrl.u32 %v1067, 7
    %v1069 = vsub.s32 0, %v1068
    %v1070 = vrot.slane %v1065, %v1069
    %1073 = vrot.lane.b32.xlu0 %v1060, 32
    %v1074 = vpop.permute.xlu0 %1073
    %v1075 = vsel %vm120, %v1074, 0
    %1077 = vmatprep.subr.mxu0 0.0
    %1078 = vmatpush1.msra.mxu0 %v1061
    %1079 = vmatprep.subr.mxu0 0.0
    %1080 = vmatpush1.msra.mxu0 %v1062
    %1081 = vmatprep.subr.mxu0 0.0
    %1082 = vmatpush1.msra.mxu0 %v1063
    %1083 = vmatprep.subr.mxu0 0.0
    %1084 = vmatpush1.msra.mxu0 %v1064
    %1085 = vmatprep.subr.mxu0 0.0
    %1086 = vmatpush1.msra.mxu0 0.0
    %1087 = vmatprep.subr.mxu0 0.0
    %1088 = vmatpush1.msra.mxu0 0.0
    %1089 = vmatprep.subr.mxu0 0.0
    %1090 = vmatpush1.msra.mxu0 0.0
    %1091 = vmatprep.subr.mxu0 0.0
    %1092 = vmatpush1.msra.mxu0 0.0
    %1093 = vmatprep.subr.mxu0 0.0
    %1094 = vmatpush1.msra.mxu0 0.0
    %1095 = vmatprep.subr.mxu0 0.0
    %1096 = vmatpush1.msra.mxu0 0.0
    %1097 = vmatprep.subr.mxu0 0.0
    %1098 = vmatpush1.msra.mxu0 0.0
    %1099 = vmatprep.subr.mxu0 0.0
    %1100 = vmatpush1.msra.mxu0 0.0
    %1101 = vmatprep.subr.mxu0 0.0
    %1102 = vmatpush1.msra.mxu0 0.0
    %1103 = vmatprep.subr.mxu0 0.0
    %1104 = vmatpush1.msra.mxu0 0.0
    %1105 = vmatprep.subr.mxu0 0.0
    %1106 = vmatpush1.msra.mxu0 0.0
    %1107 = vmatprep.subr.mxu0 0.0
    %1108 = vmatpush1.msra.mxu0 0.0
    %1109 = vmatprep.subr.mxu0 0.0
    %1110 = vmatpush1.msra.mxu0 0.0
    %1111 = vmatprep.subr.mxu0 0.0
    %1112 = vmatpush1.msra.mxu0 0.0
    %1113 = vmatprep.subr.mxu0 0.0
    %1114 = vmatpush1.msra.mxu0 0.0
    %1115 = vmatprep.subr.mxu0 0.0
    %1116 = vmatpush1.msra.mxu0 0.0
    %1117 = vmatprep.subr.mxu0 0.0
    %1118 = vmatpush1.msra.mxu0 0.0
    %1119 = vmatprep.subr.mxu0 0.0
    %1120 = vmatpush1.msra.mxu0 0.0
    %1121 = vmatprep.subr.mxu0 0.0
    %1122 = vmatpush1.msra.mxu0 0.0
    %1123 = vmatprep.subr.mxu0 0.0
    %1124 = vmatpush1.msra.mxu0 0.0
    %1125 = vmatprep.subr.mxu0 0.0
    %1126 = vmatpush1.msra.mxu0 0.0
    %1127 = vmatprep.subr.mxu0 0.0
    %1128 = vmatpush1.msra.mxu0 0.0
    %1129 = vmatprep.subr.mxu0 0.0
    %1130 = vmatpush1.msra.mxu0 0.0
    %1131 = vmatprep.subr.mxu0 0.0
    %1132 = vmatpush1.msra.mxu0 0.0
    %1133 = vmatprep.subr.mxu0 0.0
    %1134 = vmatpush1.msra.mxu0 0.0
    %1135 = vmatprep.subr.mxu0 0.0
    %1136 = vmatpush1.msra.mxu0 0.0
    %1137 = vmatprep.subr.mxu0 0.0
    %1138 = vmatpush1.msra.mxu0 0.0
    %1139 = vmatprep.subr.mxu0 0.0
    %1140 = vmatpush1.msra.mxu0 0.0
    %1141 = vmatprep.mubr.f32.mxu0 0.0
    %1142 = vmatmul.mubr.f32.gmra.mrb[0].mxu0 %v1075
    %v1143 = vpop.f32.mrb[0].mxu0
    %v1144 = vadd.f32 %v1070, %v1143
    %v1145 = vpop.f32.mrb[0].mxu0
    %1146 = vdwg.mxu0
    %1147 = vst [vmem:[#allocation5] sm:$0xff] %v1144
    %1149 = vrot.lane.b32.xlu0 %v1053, 32
    %v1150 = vpop.permute.xlu0 %1149
    %vm1152 = vcmask 261127
    %1153 = vst.msk [vmem:[#allocation6 - $0x7] sm:$0x80] %vm1152, %v1150
    %1155 = vrot.lane.b32.xlu0 %v1047, 96
    %v1156 = vpop.permute.xlu0 %1155
    %1158 = vst.msk [vmem:[#allocation8 - $0x7] sm:$0x80] %vm1152, %v1156
    // Predicated region
    $region42: #{char_lstm_forward_seq.1} parent=1 // pred_check
      _
    $region43: #{char_lstm_forward_seq.1} parent=1 // pred_check_branch
      %1160 = sbr.rel (0) target = $region45
    $region44: #{char_lstm_forward_seq.1} parent=1 // pred_region
      %s1162 = ssub.s32 128, 128
      %1163 = vsyncadd [#allocation3], %s1162
      %s1165 = sshll.u32 [#allocation5], 4
      %s1166 = int_to_ptr.vmem [resolvable:$true] %s1165
      %1168 = dma.vmem_to_hbm [thread:$0]  %s1166, 128, %s9, [#allocation3]
    $region45: #{char_lstm_forward_seq.1} parent=1 // pred_fallthru
      _
    // Predicated region
    $region46: #{char_lstm_forward_seq.1} parent=1 // pred_check
      _
    $region47: #{char_lstm_forward_seq.1} parent=1 // pred_check_branch
      %1170 = sbr.rel (0) target = $region49
    $region48: #{char_lstm_forward_seq.1} parent=1 // pred_region
      %s1172 = ssub.s32 16, 16
      %1173 = vsyncadd [#allocation7], %s1172
      %s1175 = sshll.u32 [#allocation6], 4
      %s1176 = int_to_ptr.vmem [resolvable:$true] %s1175
      %1178 = dma.vmem_to_hbm [thread:$0]  %s1176, 16, %s10, [#allocation7]
    $region49: #{char_lstm_forward_seq.1} parent=1 // pred_fallthru
      _
    // Predicated region
    $region50: #{char_lstm_forward_seq.1} parent=1 // pred_check
      _
    $region51: #{char_lstm_forward_seq.1} parent=1 // pred_check_branch
      %1180 = sbr.rel (0) target = $region53
    $region52: #{char_lstm_forward_seq.1} parent=1 // pred_region
      %s1182 = ssub.s32 16, 16
      %1183 = vsyncadd [#allocation7], %s1182
      %s1185 = sshll.u32 [#allocation8], 4
      %s1186 = int_to_ptr.vmem [resolvable:$true] %s1185
      %1188 = dma.vmem_to_hbm [thread:$0]  %s1186, 16, %s11, [#allocation7]
    $region53: #{char_lstm_forward_seq.1} parent=1 // pred_fallthru
      _
    // Predicated region
    $region54: #{char_lstm_forward_seq.1} parent=1 // pred_check
      _
    $region55: #{char_lstm_forward_seq.1} parent=1 // pred_check_branch
      %1190 = sbr.rel (0) target = $region57
    $region56: #{char_lstm_forward_seq.1} parent=1 // pred_region
      %1191 = dma.done [#allocation3], 128
    $region57: #{char_lstm_forward_seq.1} parent=1 // pred_fallthru
      _
    // Predicated region
    $region58: #{char_lstm_forward_seq.1} parent=1 // pred_check
      _
    $region59: #{char_lstm_forward_seq.1} parent=1 // pred_check_branch
      %1193 = sbr.rel (0) target = $region61
    $region60: #{char_lstm_forward_seq.1} parent=1 // pred_region
      %1194 = dma.done [#allocation7], 16
    $region61: #{char_lstm_forward_seq.1} parent=1 // pred_fallthru
      _
    // Predicated region
    $region62: #{char_lstm_forward_seq.1} parent=1 // pred_check
      _
    $region63: #{char_lstm_forward_seq.1} parent=1 // pred_check_branch
      %1196 = sbr.rel (0) target = $region65
    $region64: #{char_lstm_forward_seq.1} parent=1 // pred_region
      %1197 = dma.done [#allocation7], 16
    $region65: #{char_lstm_forward_seq.1} parent=1 // pred_fallthru
      _
    %1198 = vsyncpa [#allocation3], 1
    %1199 = vsyncpa [#allocation7], 1
    %1200 = vsyncpa [#allocation4], 1

</llo_original>
